<compile_context>
chip_gen: v6e
topology: v6e:2x2x1
jax: 0.10.0
libtpu: 0.0.40
codegen_flags: <defaults>
</compile_context>

<pallas_src>
import functools

import jax
import jax.numpy as jnp
from jax.experimental import pallas as pl
from jax.experimental.pallas import tpu as pltpu

# Masked-logit fill value.  Plain Python float (NOT a jnp array) so the kernel does
# not capture a traced constant.
_NEG = -1e30


def _round_up(x: int, m: int) -> int:
    return ((x + m - 1) // m) * m


def _default_vmem_limit() -> int:
    # v5e/v6e have 128 MiB VMEM per TensorCore, v7x only 64 MiB.  Budget ~75% of
    # physical (=> ~96 MiB on v5e/v6e, ~48 MiB on v7x); fall back to a value that
    # is safe on every generation if the query is unavailable (CPU / interpret).
    try:
        cap = getattr(pltpu.get_tpu_info(), "vmem_capacity_bytes", None)
        if cap:
            return min(int(cap) * 3 // 4, 100 * 1024 * 1024)
    except Exception:
        pass
    return 48 * 1024 * 1024


def _supcon_kernel(row_lab_ref, col_lab_ref, a_ref, c_ref, loss_ref,
                   a_sc, m_sc, l_sc, ps_sc, pc_sc,
                   *, inv_temp, out_scale, n_valid_cols, has_pad_cols):
    # row_lab_ref : [TM, 1]   int32  per-anchor labels (padded rows hold sentinel -1)
    # col_lab_ref : [1, TN]   int32  per-contrast labels (padded cols hold sentinel -2)
    # a_ref       : [TM, Dp]         anchor feature tile (matmul dtype)
    # c_ref       : [TN, Dp]         contrast feature tile (matmul dtype)
    # loss_ref    : [TM, 1]   f32    per-anchor loss
    # a_sc        : [TM, Dp]         staged (1/T)-scaled anchor tile (matmul dtype)
    # m/l/ps/pc_sc: [TM, 1]   f32    online accumulators (max, exp-sum, pos-sum, pos-count)
    i = pl.program_id(0)
    j = pl.program_id(1)
    nj = pl.num_programs(1)

    @pl.when(j == 0)
    def _init():
        # Anchor block is resident across the whole j sweep: scale (and round to the
        # matmul dtype) exactly once per anchor row instead of once per contrast tile.
        a_sc[...] = (a_ref[...].astype(jnp.float32) * inv_temp).astype(a_sc.dtype)
        m_sc[...] = jnp.full(m_sc.shape, _NEG, jnp.float32)
        l_sc[...] = jnp.zeros(l_sc.shape, jnp.float32)
        ps_sc[...] = jnp.zeros(ps_sc.shape, jnp.float32)
        pc_sc[...] = jnp.zeros(pc_sc.shape, jnp.float32)

    # s = (A / T) @ C^T : contract the feature dim of both tiles; f32 accumulation.
    s = jax.lax.dot_general(a_sc[...], c_ref[...], (((1,), (1,)), ((), ())),
                            preferred_element_type=jnp.float32)      # [TM, TN] f32
    tm, tn = s.shape

    # Positive-pair candidate mask (same label); needed on every tile.
    labels_eq = row_lab_ref[...] == col_lab_ref[...]                 # [TM, TN] bool

    def _update(s_l, pm):
        # Online log-sum-exp over the denominator-valid entries of this tile.
        m_prev = m_sc[...]
        m_new = jnp.maximum(m_prev, jnp.max(s_l, axis=1, keepdims=True))
        alpha = jnp.exp(m_prev - m_new)
        p = jnp.exp(s_l - m_new)
        l_sc[...] = alpha * l_sc[...] + jnp.sum(p, axis=1, keepdims=True)
        m_sc[...] = m_new
        # Positive-pair sums are linear in the raw scaled logits -> no rescaling.
        ps_sc[...] = ps_sc[...] + jnp.sum(pm * s, axis=1, keepdims=True)
        pc_sc[...] = pc_sc[...] + jnp.sum(pm, axis=1, keepdims=True)

    # Scalar gating: the expensive iota/compare/where mask path is only needed when
    # (a) this tile intersects the self-contrast diagonal, or (b) it is the last
    # contrast tile and that tile contains padded columns (statically known).
    diag_hit = jnp.logical_and(i * tm < (j + 1) * tn, j * tn < (i + 1) * tm)
    if has_pad_cols:
        need_mask = jnp.logical_or(diag_hit, j == nj - 1)
    else:
        need_mask = diag_hit

    @pl.when(jnp.logical_not(need_mask))
    def _fast():
        # Every column in this tile is a valid denominator entry.
        _update(s, labels_eq.astype(jnp.float32))

    @pl.when(need_mask)
    def _slow():
        row_idx = jax.lax.broadcasted_iota(jnp.int32, (tm, 1), 0) + i * tm
        col_idx = jax.lax.broadcasted_iota(jnp.int32, (1, tn), 1) + j * tn
        lmask = row_idx != col_idx                    # exclude self-contrast
        if has_pad_cols:
            lmask = jnp.logical_and(lmask, col_idx < n_valid_cols)   # padded cols
        pmask = jnp.logical_and(lmask, labels_eq)
        _update(jnp.where(lmask, s, _NEG), pmask.astype(jnp.float32))

    @pl.when(j == nj - 1)
    def _finalize():
        # log_prob_k = adc_k - log(sum_j lmask_j * exp(adc_j))   (row max cancels)
        log_z = m_sc[...] + jnp.log(l_sc[...])
        cnt = pc_sc[...]
        safe_cnt = jnp.where(cnt > 0, cnt, 1.0)
        mean_log_prob_pos = (ps_sc[...] - cnt * log_z) / safe_cnt
        # TODO(synk): anchors with zero positives produce NaN in the PyTorch
        # reference (0/0); here they are clamped to 0.
        loss_ref[...] = out_scale * jnp.where(cnt > 0, mean_log_prob_pos, 0.0)


def supcon_loss(features, labels=None, mask=None, *, temperature=0.07,
                contrast_mode='all', base_temperature=0.07,
                block_m=512, block_n=512, matmul_dtype=jnp.bfloat16,
                vmem_limit_bytes=None):
    """JAX/Pallas equivalent of SupConLoss.forward. Returns loss of shape [bsz]."""
    if features.ndim < 3:
        raise ValueError('`features` needs to be [bsz, n_views, ...]')
    if features.ndim > 3:
        features = features.reshape(features.shape[0], features.shape[1], -1)
    bsz, n_views, dim = features.shape

    if labels is not None and mask is not None:
        raise ValueError('Cannot define both `labels` and `mask`')
    if mask is not None:
        # TODO(synk): arbitrary dense [bsz, bsz] `mask` input would need a dense mask
        # tile stream; only the labels and SimCLR (labels=None) paths are ported.
        raise NotImplementedError('explicit `mask` is not supported by the Pallas kernel')
    if labels is None:
        labels = jnp.arange(bsz, dtype=jnp.int32)     # eye(bsz) <=> each sample own class
    else:
        labels = jnp.asarray(labels).reshape(-1)
        if labels.shape[0] != bsz:
            raise ValueError('Num of labels does not match num of features')
    labels = labels.astype(jnp.int32)

    if matmul_dtype is None:
        matmul_dtype = features.dtype
    matmul_dtype = jnp.dtype(matmul_dtype)

    contrast_count = n_views
    # torch.cat(torch.unbind(features, dim=1), dim=0) -> [n_views*bsz, dim]
    contrast_feature = jnp.transpose(features, (1, 0, 2)).reshape(n_views * bsz, dim)
    col_labels = jnp.tile(labels, n_views)

    if contrast_mode == 'one':
        anchor_feature = features[:, 0]
        anchor_count = 1
    elif contrast_mode == 'all':
        anchor_feature = contrast_feature
        anchor_count = contrast_count
    else:
        raise ValueError(f'Unknown mode: {contrast_mode}')

    n_anchor = anchor_count * bsz
    n_contrast = contrast_count * bsz
    row_labels = col_labels[:n_anchor]

    # --- tiling: TM anchors x TN contrast columns, both multiples of 128 ---
    block_m = _round_up(block_m, 128)
    block_n = _round_up(block_n, 128)
    tm = min(block_m, _round_up(n_anchor, 128))
    tn = min(block_n, _round_up(n_contrast, 128))
    n_anchor_pad = _round_up(n_anchor, tm)
    n_contrast_pad = _round_up(n_contrast, tn)
    d_pad = _round_up(dim, 128)                       # lane-dense feature tiles
    grid = (n_anchor_pad // tm, n_contrast_pad // tn)

    anchor_p = jnp.pad(anchor_feature,
                       ((0, n_anchor_pad - n_anchor), (0, d_pad - dim))).astype(matmul_dtype)
    contrast_p = jnp.pad(contrast_feature,
                         ((0, n_contrast_pad - n_contrast), (0, d_pad - dim))).astype(matmul_dtype)
    row_lab_p = jnp.pad(row_labels, (0, n_anchor_pad - n_anchor),
                        constant_values=-1).reshape(n_anchor_pad, 1)
    col_lab_p = jnp.pad(col_labels, (0, n_contrast_pad - n_contrast),
                        constant_values=-2).reshape(1, n_contrast_pad)

    if vmem_limit_bytes is None:
        vmem_limit_bytes = _default_vmem_limit()

    kernel = functools.partial(
        _supcon_kernel,
        inv_temp=1.0 / float(temperature),
        out_scale=-(float(temperature) / float(base_temperature)),
        n_valid_cols=n_contrast,
        has_pad_cols=(n_contrast_pad > n_contrast))

    out = pl.pallas_call(
        kernel,
        out_shape=jax.ShapeDtypeStruct((n_anchor_pad, 1), jnp.float32),
        grid_spec=pltpu.PrefetchScalarGridSpec(
            num_scalar_prefetch=0,
            grid=grid,
            in_specs=[
                pl.BlockSpec((tm, 1), lambda i, j: (i, 0)),       # row labels
                pl.BlockSpec((1, tn), lambda i, j: (0, j)),       # col labels
                pl.BlockSpec((tm, d_pad), lambda i, j: (i, 0)),   # anchor tile
                pl.BlockSpec((tn, d_pad), lambda i, j: (j, 0)),   # contrast tile
            ],
            out_specs=pl.BlockSpec((tm, 1), lambda i, j: (i, 0)),
            scratch_shapes=[
                pltpu.VMEM((tm, d_pad), matmul_dtype),   # staged (1/T)-scaled anchors
                pltpu.VMEM((tm, 1), jnp.float32),        # running max
                pltpu.VMEM((tm, 1), jnp.float32),        # running exp-sum
                pltpu.VMEM((tm, 1), jnp.float32),        # positive logit sum
                pltpu.VMEM((tm, 1), jnp.float32),        # positive count
            ]),
        compiler_params=pltpu.CompilerParams(
            # anchor tiles shard across TensorCores; contrast axis is a reduction.
            dimension_semantics=("parallel", "arbitrary"),
            vmem_limit_bytes=int(vmem_limit_bytes)),
    )(row_lab_p, col_lab_p, anchor_p, contrast_p)

    per_anchor = out[:n_anchor, 0]
    return per_anchor.reshape(anchor_count, bsz).sum(axis=0)  # matches loss.view(...).sum(0)


def _supcon_loss_ref(features, labels, *, temperature=0.07, base_temperature=0.07,
                     matmul_dtype=jnp.float32):
    """Dense pure-JAX reference mirroring the PyTorch forward (contrast_mode='all').

    `matmul_dtype` mirrors the kernel's operand quantization (cast -> f32 scale ->
    cast) so kernel and reference can be compared tightly even for bf16 operands."""
    bsz, n_views, dim = features.shape
    labels = labels.reshape(-1, 1)
    mask = (labels == labels.T).astype(jnp.float32)
    cf = jnp.transpose(features, (1, 0, 2)).reshape(n_views * bsz, dim)
    n = n_views * bsz
    c_q = cf.astype(matmul_dtype)
    a_q = (c_q.astype(jnp.float32) * (1.0 / temperature)).astype(matmul_dtype)
    adc = jax.lax.dot_general(a_q, c_q, (((1,), (1,)), ((), ())),
                              preferred_element_type=jnp.float32)
    logits = adc - jnp.max(adc, axis=1, keepdims=True)
    mask = jnp.tile(mask, (n_views, n_views))
    lmask = 1.0 - jnp.eye(n, dtype=jnp.float32)
    mask = mask * lmask
    exp_logits = jnp.exp(logits) * lmask
    log_prob = logits - jnp.log(exp_logits.sum(1, keepdims=True))
    mlpp = (mask * log_prob).sum(1) / mask.sum(1)
    loss = -(temperature / base_temperature) * mlpp
    return loss.reshape(n_views, bsz).sum(0)


if __name__ == "__main__":
    key = jax.random.PRNGKey(0)
    k1, k2, k3, k4 = jax.random.split(key, 4)

    # --- small supervised test (single tile), f32 matmul path: tight check ---
    bsz, n_views, dim = 8, 2, 32
    features = jax.random.normal(k1, (bsz, n_views, dim), dtype=jnp.float32)
    features = features / jnp.linalg.norm(features, axis=-1, keepdims=True)
    labels = jax.random.randint(k2, (bsz,), 0, 4)

    out = jax.block_until_ready(
        supcon_loss(features, labels=labels, matmul_dtype=jnp.float32))
    ref = _supcon_loss_ref(features, labels, matmul_dtype=jnp.float32)
    assert out.shape == (bsz,)
    assert jnp.allclose(out, ref, rtol=2e-3, atol=2e-3), (out, ref)

    # --- SimCLR path (labels=None -> eye mask), f32 matmul path ---
    out_simclr = jax.block_until_ready(supcon_loss(features, matmul_dtype=jnp.float32))
    ref_simclr = _supcon_loss_ref(features, jnp.arange(bsz), matmul_dtype=jnp.float32)
    assert jnp.allclose(out_simclr, ref_simclr, rtol=2e-3, atol=2e-3), (out_simclr, ref_simclr)

    # --- multi-tile path (row/col padding, fast & slow mask paths), default bf16 ---
    bsz2, nv2, d2 = 100, 2, 48
    f2 = jax.random.normal(k3, (bsz2, nv2, d2), dtype=jnp.float32)
    f2 = f2 / jnp.linalg.norm(f2, axis=-1, keepdims=True)
    l2 = jax.random.randint(k4, (bsz2,), 0, 10)
    out2 = jax.block_until_ready(supcon_loss(f2, labels=l2, block_m=128, block_n=128))
    ref2_bf16 = _supcon_loss_ref(f2, l2, matmul_dtype=jnp.bfloat16)   # mirrored quantization
    ref2_f32 = _supcon_loss_ref(f2, l2, matmul_dtype=jnp.float32)     # sanity vs full f32
    assert jnp.allclose(out2, ref2_bf16, rtol=5e-3, atol=5e-3), (out2, ref2_bf16)
    assert jnp.allclose(out2, ref2_f32, rtol=1e-1, atol=1e-1), (out2, ref2_f32)

    print("KERNEL_OK")
</pallas_src>

<mosaic_0001>
module attributes {stable_mosaic.version = 11 : i64} {
  func.func @_supcon_kernel(%arg0: i32, %arg1: i32, %arg2: memref<128x1xi32, #tpu.memory_space<vmem>>, %arg3: memref<1x128xi32, #tpu.memory_space<vmem>>, %arg4: memref<128x128xf32, #tpu.memory_space<vmem>>, %arg5: memref<128x128xf32, #tpu.memory_space<vmem>>, %arg6: memref<128x1xf32, #tpu.memory_space<vmem>>, %arg7: memref<128x128xf32, #tpu.memory_space<vmem>>, %arg8: memref<128x1xf32, #tpu.memory_space<vmem>>, %arg9: memref<128x1xf32, #tpu.memory_space<vmem>>, %arg10: memref<128x1xf32, #tpu.memory_space<vmem>>, %arg11: memref<128x1xf32, #tpu.memory_space<vmem>>) attributes {dimension_semantics = [#tpu.dimension_semantics<parallel>, #tpu.dimension_semantics<arbitrary>], iteration_bounds = array<i64: 1, 1>, scalar_prefetch = 0 : i64, scratch_operands = 5 : i64, tpu.core_type = #tpu.core_type<tc>, window_params = [{transform_indices = @transform_0, window_bounds = array<i64: 128, 1>}, {transform_indices = @transform_1, window_bounds = array<i64: 1, 128>}, {transform_indices = @transform_2, window_bounds = array<i64: 128, 128>}, {transform_indices = @transform_3, window_bounds = array<i64: 128, 128>}, {transform_indices = @transform_4, window_bounds = array<i64: 128, 1>}]} {
    %c0_i32 = arith.constant 0 : i32
    %0 = arith.cmpi eq, %arg1, %c0_i32 : i32
    %1 = arith.extui %0 : i1 to i32
    %c0_i32_0 = arith.constant 0 : i32
    %2 = arith.cmpi ne, %1, %c0_i32_0 : i32
    scf.if %2 {
      %c0_17 = arith.constant 0 : index
      %c0_18 = arith.constant 0 : index
      %30 = vector.load %arg4[%c0_17, %c0_18] : memref<128x128xf32, #tpu.memory_space<vmem>>, vector<128x128xf32>
      %cst_19 = arith.constant 14.2857141 : f32
      %31 = vector.broadcast %cst_19 : f32 to vector<128x128xf32>
      %32 = arith.mulf %30, %31 : vector<128x128xf32>
      %c0_20 = arith.constant 0 : index
      %c0_21 = arith.constant 0 : index
      %33 = vector.load %arg7[%c0_20, %c0_21] : memref<128x128xf32, #tpu.memory_space<vmem>>, vector<128x128xf32>
      tpu.vector_store %arg7[%c0_20, %c0_21], %32 {strides = array<i32>} : memref<128x128xf32, #tpu.memory_space<vmem>>, vector<128x128xf32>,
      %cst_22 = arith.constant -1.000000e+30 : f32
      %34 = vector.broadcast %cst_22 : f32 to vector<128x1xf32>
      %c0_23 = arith.constant 0 : index
      %c0_24 = arith.constant 0 : index
      %35 = vector.load %arg8[%c0_23, %c0_24] : memref<128x1xf32, #tpu.memory_space<vmem>>, vector<128x1xf32>
      tpu.vector_store %arg8[%c0_23, %c0_24], %34 {strides = array<i32>} : memref<128x1xf32, #tpu.memory_space<vmem>>, vector<128x1xf32>,
      %cst_25 = arith.constant 0.000000e+00 : f32
      %36 = vector.broadcast %cst_25 : f32 to vector<128x1xf32>
      %c0_26 = arith.constant 0 : index
      %c0_27 = arith.constant 0 : index
      %37 = vector.load %arg9[%c0_26, %c0_27] : memref<128x1xf32, #tpu.memory_space<vmem>>, vector<128x1xf32>
      tpu.vector_store %arg9[%c0_26, %c0_27], %36 {strides = array<i32>} : memref<128x1xf32, #tpu.memory_space<vmem>>, vector<128x1xf32>,
      %cst_28 = arith.constant 0.000000e+00 : f32
      %38 = vector.broadcast %cst_28 : f32 to vector<128x1xf32>
      %c0_29 = arith.constant 0 : index
      %c0_30 = arith.constant 0 : index
      %39 = vector.load %arg10[%c0_29, %c0_30] : memref<128x1xf32, #tpu.memory_space<vmem>>, vector<128x1xf32>
      tpu.vector_store %arg10[%c0_29, %c0_30], %38 {strides = array<i32>} : memref<128x1xf32, #tpu.memory_space<vmem>>, vector<128x1xf32>,
      %cst_31 = arith.constant 0.000000e+00 : f32
      %40 = vector.broadcast %cst_31 : f32 to vector<128x1xf32>
      %c0_32 = arith.constant 0 : index
      %c0_33 = arith.constant 0 : index
      %41 = vector.load %arg11[%c0_32, %c0_33] : memref<128x1xf32, #tpu.memory_space<vmem>>, vector<128x1xf32>
      tpu.vector_store %arg11[%c0_32, %c0_33], %40 {strides = array<i32>} : memref<128x1xf32, #tpu.memory_space<vmem>>, vector<128x1xf32>,
    } else {
    }
    %c0 = arith.constant 0 : index
    %c0_1 = arith.constant 0 : index
    %3 = vector.load %arg7[%c0, %c0_1] : memref<128x128xf32, #tpu.memory_space<vmem>>, vector<128x128xf32>
    %c0_2 = arith.constant 0 : index
    %c0_3 = arith.constant 0 : index
    %4 = vector.load %arg5[%c0_2, %c0_3] : memref<128x128xf32, #tpu.memory_space<vmem>>, vector<128x128xf32>
    %cst = arith.constant dense<0.000000e+00> : vector<128x128xf32>
    %5 = tpu.matmul %3, %4, %cst {dimension_numbers = #tpu.dot_dimension_numbers<[1], [1], [0], [0], [0, 0, 1, 0], [], []>} : vector<128x128xf32>, vector<128x128xf32>, vector<128x128xf32> -> vector<128x128xf32>
    %c0_4 = arith.constant 0 : index
    %c0_5 = arith.constant 0 : index
    %6 = vector.load %arg2[%c0_4, %c0_5] : memref<128x1xi32, #tpu.memory_space<vmem>>, vector<128x1xi32>
    %c0_6 = arith.constant 0 : index
    %c0_7 = arith.constant 0 : index
    %7 = vector.load %arg3[%c0_6, %c0_7] : memref<1x128xi32, #tpu.memory_space<vmem>>, vector<1x128xi32>
    %8 = vector.broadcast %6 : vector<128x1xi32> to vector<128x128xi32>
    %9 = vector.broadcast %7 : vector<1x128xi32> to vector<128x128xi32>
    %10 = arith.cmpi eq, %8, %9 : vector<128x128xi32>
    %c128_i32 = arith.constant 128 : i32
    %11 = arith.muli %arg0, %c128_i32 : i32
    %c1_i32 = arith.constant 1 : i32
    %12 = arith.addi %arg1, %c1_i32 : i32
    %c128_i32_8 = arith.constant 128 : i32
    %13 = arith.muli %12, %c128_i32_8 : i32
    %14 = arith.cmpi slt, %11, %13 : i32
    %c128_i32_9 = arith.constant 128 : i32
    %15 = arith.muli %arg1, %c128_i32_9 : i32
    %c1_i32_10 = arith.constant 1 : i32
    %16 = arith.addi %arg0, %c1_i32_10 : i32
    %c128_i32_11 = arith.constant 128 : i32
    %17 = arith.muli %16, %c128_i32_11 : i32
    %18 = arith.cmpi slt, %15, %17 : i32
    %19 = arith.andi %14, %18 : i1
    %c0_i32_12 = arith.constant 0 : i32
    %20 = arith.cmpi eq, %arg1, %c0_i32_12 : i32
    %21 = arith.ori %19, %20 : i1
    %true = arith.constant true
    %22 = arith.xori %21, %true : i1
    %23 = arith.extui %22 : i1 to i32
    %c0_i32_13 = arith.constant 0 : i32
    %24 = arith.cmpi ne, %23, %c0_i32_13 : i32
    scf.if %24 {
      %30 = arith.extui %10 : vector<128x128xi1> to vector<128x128xi32>
      %31 = arith.sitofp %30 : vector<128x128xi32> to vector<128x128xf32>
      %c0_17 = arith.constant 0 : index
      %c0_18 = arith.constant 0 : index
      %32 = vector.load %arg8[%c0_17, %c0_18] : memref<128x1xf32, #tpu.memory_space<vmem>>, vector<128x1xf32>
      %cst_19 = arith.constant dense<0xFF800000> : vector<128xf32>
      %33 = vector.multi_reduction <maximumf>, %5, %cst_19 [1] : vector<128x128xf32> to vector<128xf32>
      %34 = vector.shape_cast %33 : vector<128xf32> to vector<128x1xf32>
      %35 = arith.maximumf %32, %34 : vector<128x1xf32>
      %36 = arith.subf %32, %35 : vector<128x1xf32>
      %37 = math.exp %36 : vector<128x1xf32>
      %38 = vector.broadcast %35 : vector<128x1xf32> to vector<128x128xf32>
      %39 = arith.subf %5, %38 : vector<128x128xf32>
      %40 = math.exp %39 : vector<128x128xf32>
      %c0_20 = arith.constant 0 : index
      %c0_21 = arith.constant 0 : index
      %41 = vector.load %arg9[%c0_20, %c0_21] : memref<128x1xf32, #tpu.memory_space<vmem>>, vector<128x1xf32>
      %42 = arith.mulf %37, %41 : vector<128x1xf32>
      %cst_22 = arith.constant dense<0.000000e+00> : vector<128xf32>
      %43 = vector.multi_reduction <add>, %40, %cst_22 [1] : vector<128x128xf32> to vector<128xf32>
      %44 = vector.shape_cast %43 : vector<128xf32> to vector<128x1xf32>
      %45 = arith.addf %42, %44 : vector<128x1xf32>
      %c0_23 = arith.constant 0 : index
      %c0_24 = arith.constant 0 : index
      %46 = vector.load %arg9[%c0_23, %c0_24] : memref<128x1xf32, #tpu.memory_space<vmem>>, vector<128x1xf32>
      tpu.vector_store %arg9[%c0_23, %c0_24], %45 {strides = array<i32>} : memref<128x1xf32, #tpu.memory_space<vmem>>, vector<128x1xf32>,
      %c0_25 = arith.constant 0 : index
      %c0_26 = arith.constant 0 : index
      %47 = vector.load %arg8[%c0_25, %c0_26] : memref<128x1xf32, #tpu.memory_space<vmem>>, vector<128x1xf32>
      tpu.vector_store %arg8[%c0_25, %c0_26], %35 {strides = array<i32>} : memref<128x1xf32, #tpu.memory_space<vmem>>, vector<128x1xf32>,
      %c0_27 = arith.constant 0 : index
      %c0_28 = arith.constant 0 : index
      %48 = vector.load %arg10[%c0_27, %c0_28] : memref<128x1xf32, #tpu.memory_space<vmem>>, vector<128x1xf32>
      %49 = arith.mulf %31, %5 : vector<128x128xf32>
      %cst_29 = arith.constant dense<0.000000e+00> : vector<128xf32>
      %50 = vector.multi_reduction <add>, %49, %cst_29 [1] : vector<128x128xf32> to vector<128xf32>
      %51 = vector.shape_cast %50 : vector<128xf32> to vector<128x1xf32>
      %52 = arith.addf %48, %51 : vector<128x1xf32>
      %c0_30 = arith.constant 0 : index
      %c0_31 = arith.constant 0 : index
      %53 = vector.load %arg10[%c0_30, %c0_31] : memref<128x1xf32, #tpu.memory_space<vmem>>, vector<128x1xf32>
      tpu.vector_store %arg10[%c0_30, %c0_31], %52 {strides = array<i32>} : memref<128x1xf32, #tpu.memory_space<vmem>>, vector<128x1xf32>,
      %c0_32 = arith.constant 0 : index
      %c0_33 = arith.constant 0 : index
      %54 = vector.load %arg11[%c0_32, %c0_33] : memref<128x1xf32, #tpu.memory_space<vmem>>, vector<128x1xf32>
      %cst_34 = arith.constant dense<0.000000e+00> : vector<128xf32>
      %55 = vector.multi_reduction <add>, %31, %cst_34 [1] : vector<128x128xf32> to vector<128xf32>
      %56 = vector.shape_cast %55 : vector<128xf32> to vector<128x1xf32>
      %57 = arith.addf %54, %56 : vector<128x1xf32>
      %c0_35 = arith.constant 0 : index
      %c0_36 = arith.constant 0 : index
      %58 = vector.load %arg11[%c0_35, %c0_36] : memref<128x1xf32, #tpu.memory_space<vmem>>, vector<128x1xf32>
      tpu.vector_store %arg11[%c0_35, %c0_36], %57 {strides = array<i32>} : memref<128x1xf32, #tpu.memory_space<vmem>>, vector<128x1xf32>,
    } else {
    }
    %25 = arith.extui %21 : i1 to i32
    %c0_i32_14 = arith.constant 0 : i32
    %26 = arith.cmpi ne, %25, %c0_i32_14 : i32
    scf.if %26 {
      %30 = tpu.iota {dimensions = array<i32: 0>} : vector<128x1xi32>
      %c128_i32_17 = arith.constant 128 : i32
      %31 = arith.muli %arg0, %c128_i32_17 : i32
      %32 = vector.broadcast %31 : i32 to vector<128x1xi32>
      %33 = arith.addi %30, %32 : vector<128x1xi32>
      %34 = tpu.iota {dimensions = array<i32: 1>} : vector<1x128xi32>
      %c128_i32_18 = arith.constant 128 : i32
      %35 = arith.muli %arg1, %c128_i32_18 : i32
      %36 = vector.broadcast %35 : i32 to vector<1x128xi32>
      %37 = arith.addi %34, %36 : vector<1x128xi32>
      %38 = vector.broadcast %33 : vector<128x1xi32> to vector<128x128xi32>
      %39 = vector.broadcast %37 : vector<1x128xi32> to vector<128x128xi32>
      %40 = arith.cmpi ne, %38, %39 : vector<128x128xi32>
      %c16_i32 = arith.constant 16 : i32
      %41 = vector.broadcast %c16_i32 : i32 to vector<1x128xi32>
      %42 = arith.cmpi slt, %37, %41 : vector<1x128xi32>
      %43 = vector.broadcast %42 : vector<1x128xi1> to vector<128x128xi1>
      %44 = arith.andi %40, %43 : vector<128x128xi1>
      %45 = arith.andi %44, %10 : vector<128x128xi1>
      %cst_19 = arith.constant -1.000000e+30 : f32
      %46 = vector.broadcast %cst_19 : f32 to vector<128x128xf32>
      %47 = arith.select %44, %5, %46 : vector<128x128xi1>, vector<128x128xf32>
      %48 = arith.extui %45 : vector<128x128xi1> to vector<128x128xi32>
      %49 = arith.sitofp %48 : vector<128x128xi32> to vector<128x128xf32>
      %c0_20 = arith.constant 0 : index
      %c0_21 = arith.constant 0 : index
      %50 = vector.load %arg8[%c0_20, %c0_21] : memref<128x1xf32, #tpu.memory_space<vmem>>, vector<128x1xf32>
      %cst_22 = arith.constant dense<0xFF800000> : vector<128xf32>
      %51 = vector.multi_reduction <maximumf>, %47, %cst_22 [1] : vector<128x128xf32> to vector<128xf32>
      %52 = vector.shape_cast %51 : vector<128xf32> to vector<128x1xf32>
      %53 = arith.maximumf %50, %52 : vector<128x1xf32>
      %54 = arith.subf %50, %53 : vector<128x1xf32>
      %55 = math.exp %54 : vector<128x1xf32>
      %56 = vector.broadcast %53 : vector<128x1xf32> to vector<128x128xf32>
      %57 = arith.subf %47, %56 : vector<128x128xf32>
      %58 = math.exp %57 : vector<128x128xf32>
      %c0_23 = arith.constant 0 : index
      %c0_24 = arith.constant 0 : index
      %59 = vector.load %arg9[%c0_23, %c0_24] : memref<128x1xf32, #tpu.memory_space<vmem>>, vector<128x1xf32>
      %60 = arith.mulf %55, %59 : vector<128x1xf32>
      %cst_25 = arith.constant dense<0.000000e+00> : vector<128xf32>
      %61 = vector.multi_reduction <add>, %58, %cst_25 [1] : vector<128x128xf32> to vector<128xf32>
      %62 = vector.shape_cast %61 : vector<128xf32> to vector<128x1xf32>
      %63 = arith.addf %60, %62 : vector<128x1xf32>
      %c0_26 = arith.constant 0 : index
      %c0_27 = arith.constant 0 : index
      %64 = vector.load %arg9[%c0_26, %c0_27] : memref<128x1xf32, #tpu.memory_space<vmem>>, vector<128x1xf32>
      tpu.vector_store %arg9[%c0_26, %c0_27], %63 {strides = array<i32>} : memref<128x1xf32, #tpu.memory_space<vmem>>, vector<128x1xf32>,
      %c0_28 = arith.constant 0 : index
      %c0_29 = arith.constant 0 : index
      %65 = vector.load %arg8[%c0_28, %c0_29] : memref<128x1xf32, #tpu.memory_space<vmem>>, vector<128x1xf32>
      tpu.vector_store %arg8[%c0_28, %c0_29], %53 {strides = array<i32>} : memref<128x1xf32, #tpu.memory_space<vmem>>, vector<128x1xf32>,
      %c0_30 = arith.constant 0 : index
      %c0_31 = arith.constant 0 : index
      %66 = vector.load %arg10[%c0_30, %c0_31] : memref<128x1xf32, #tpu.memory_space<vmem>>, vector<128x1xf32>
      %67 = arith.mulf %49, %5 : vector<128x128xf32>
      %cst_32 = arith.constant dense<0.000000e+00> : vector<128xf32>
      %68 = vector.multi_reduction <add>, %67, %cst_32 [1] : vector<128x128xf32> to vector<128xf32>
      %69 = vector.shape_cast %68 : vector<128xf32> to vector<128x1xf32>
      %70 = arith.addf %66, %69 : vector<128x1xf32>
      %c0_33 = arith.constant 0 : index
      %c0_34 = arith.constant 0 : index
      %71 = vector.load %arg10[%c0_33, %c0_34] : memref<128x1xf32, #tpu.memory_space<vmem>>, vector<128x1xf32>
      tpu.vector_store %arg10[%c0_33, %c0_34], %70 {strides = array<i32>} : memref<128x1xf32, #tpu.memory_space<vmem>>, vector<128x1xf32>,
      %c0_35 = arith.constant 0 : index
      %c0_36 = arith.constant 0 : index
      %72 = vector.load %arg11[%c0_35, %c0_36] : memref<128x1xf32, #tpu.memory_space<vmem>>, vector<128x1xf32>
      %cst_37 = arith.constant dense<0.000000e+00> : vector<128xf32>
      %73 = vector.multi_reduction <add>, %49, %cst_37 [1] : vector<128x128xf32> to vector<128xf32>
      %74 = vector.shape_cast %73 : vector<128xf32> to vector<128x1xf32>
      %75 = arith.addf %72, %74 : vector<128x1xf32>
      %c0_38 = arith.constant 0 : index
      %c0_39 = arith.constant 0 : index
      %76 = vector.load %arg11[%c0_38, %c0_39] : memref<128x1xf32, #tpu.memory_space<vmem>>, vector<128x1xf32>
      tpu.vector_store %arg11[%c0_38, %c0_39], %75 {strides = array<i32>} : memref<128x1xf32, #tpu.memory_space<vmem>>, vector<128x1xf32>,
    } else {
    }
    %c0_i32_15 = arith.constant 0 : i32
    %27 = arith.cmpi eq, %arg1, %c0_i32_15 : i32
    %28 = arith.extui %27 : i1 to i32
    %c0_i32_16 = arith.constant 0 : i32
    %29 = arith.cmpi ne, %28, %c0_i32_16 : i32
    scf.if %29 {
      %c0_17 = arith.constant 0 : index
      %c0_18 = arith.constant 0 : index
      %30 = vector.load %arg8[%c0_17, %c0_18] : memref<128x1xf32, #tpu.memory_space<vmem>>, vector<128x1xf32>
      %c0_19 = arith.constant 0 : index
      %c0_20 = arith.constant 0 : index
      %31 = vector.load %arg9[%c0_19, %c0_20] : memref<128x1xf32, #tpu.memory_space<vmem>>, vector<128x1xf32>
      %32 = math.log %31 : vector<128x1xf32>
      %33 = arith.addf %30, %32 : vector<128x1xf32>
      %c0_21 = arith.constant 0 : index
      %c0_22 = arith.constant 0 : index
      %34 = vector.load %arg11[%c0_21, %c0_22] : memref<128x1xf32, #tpu.memory_space<vmem>>, vector<128x1xf32>
      %cst_23 = arith.constant 0.000000e+00 : f32
      %35 = vector.broadcast %cst_23 : f32 to vector<128x1xf32>
      %36 = arith.cmpf ogt, %34, %35 : vector<128x1xf32>
      %cst_24 = arith.constant 1.000000e+00 : f32
      %37 = vector.broadcast %cst_24 : f32 to vector<128x1xf32>
      %38 = arith.select %36, %34, %37 : vector<128x1xi1>, vector<128x1xf32>
      %c0_25 = arith.constant 0 : index
      %c0_26 = arith.constant 0 : index
      %39 = vector.load %arg10[%c0_25, %c0_26] : memref<128x1xf32, #tpu.memory_space<vmem>>, vector<128x1xf32>
      %40 = arith.mulf %34, %33 : vector<128x1xf32>
      %41 = arith.subf %39, %40 : vector<128x1xf32>
      %42 = arith.divf %41, %38 : vector<128x1xf32>
      %cst_27 = arith.constant 0.000000e+00 : f32
      %43 = vector.broadcast %cst_27 : f32 to vector<128x1xf32>
      %44 = arith.cmpf ogt, %34, %43 : vector<128x1xf32>
      %cst_28 = arith.constant 0.000000e+00 : f32
      %45 = vector.broadcast %cst_28 : f32 to vector<128x1xf32>
      %46 = arith.select %44, %42, %45 : vector<128x1xi1>, vector<128x1xf32>
      %cst_29 = arith.constant -1.000000e+00 : f32
      %47 = vector.broadcast %cst_29 : f32 to vector<128x1xf32>
      %48 = arith.mulf %47, %46 : vector<128x1xf32>
      %c0_30 = arith.constant 0 : index
      %c0_31 = arith.constant 0 : index
      %49 = vector.load %arg6[%c0_30, %c0_31] : memref<128x1xf32, #tpu.memory_space<vmem>>, vector<128x1xf32>
      tpu.vector_store %arg6[%c0_30, %c0_31], %48 {strides = array<i32>} : memref<128x1xf32, #tpu.memory_space<vmem>>, vector<128x1xf32>,
    } else {
    }
    return
  }
  func.func @transform_0(%arg0: i32, %arg1: i32) -> (i32, i32) {
    %c0_i32 = arith.constant 0 : i32
    %c0_i32_0 = arith.constant 0 : i32
    return %arg0, %c0_i32 : i32, i32
  }
  func.func @transform_1(%arg0: i32, %arg1: i32) -> (i32, i32) {
    %c0_i32 = arith.constant 0 : i32
    %c0_i32_0 = arith.constant 0 : i32
    return %c0_i32, %arg1 : i32, i32
  }
  func.func @transform_2(%arg0: i32, %arg1: i32) -> (i32, i32) {
    %c0_i32 = arith.constant 0 : i32
    %c0_i32_0 = arith.constant 0 : i32
    return %arg0, %c0_i32 : i32, i32
  }
  func.func @transform_3(%arg0: i32, %arg1: i32) -> (i32, i32) {
    %c0_i32 = arith.constant 0 : i32
    %c0_i32_0 = arith.constant 0 : i32
    return %arg1, %c0_i32 : i32, i32
  }
  func.func @transform_4(%arg0: i32, %arg1: i32) -> (i32, i32) {
    %c0_i32 = arith.constant 0 : i32
    %c0_i32_0 = arith.constant 0 : i32
    return %arg0, %c0_i32 : i32, i32
  }
}

</mosaic_0001>

<llo_original>
// kernel: tpu_custom_call.1
$region0: #{tpu_custom_call.1}
  #allocation0 [shape = 'u32[]', space=smem, size = 0x4, offset = 0x4, fixed_abs, tag = 'smem constant byte address 0x4 - core index']
  #allocation1 [shape = 'u32[144,128]{1,0:T(1,128)}', space=vmem, size = 0x12000, scoped, tag = 'internal scratch']
  #allocation2 [shape = 'f32[128,128]{1,0:T(8,128)}', space=vmem, size = 0x10000, scoped, tag = 'scratch operand']
  #allocation3 [shape = 'f32[128,1]{1,0:T(8,128)}', space=vmem, size = 0x10000, scoped, tag = 'scratch operand']
  #allocation4 [shape = 'f32[128,1]{1,0:T(8,128)}', space=vmem, size = 0x10000, scoped, tag = 'scratch operand']
  #allocation5 [shape = 'f32[128,1]{1,0:T(8,128)}', space=vmem, size = 0x10000, scoped, tag = 'scratch operand']
  #allocation6 [shape = 'f32[128,1]{1,0:T(8,128)}', space=vmem, size = 0x10000, scoped, tag = 'scratch operand']
  %s0 = inlined_call_operand.vmem [shape: s32[128,1], index: 0, kind: input, shape index: {}]
  %s1 = inlined_call_operand.vmem [shape: s32[1,128], index: 1, kind: input, shape index: {}]
  %s2 = inlined_call_operand.vmem [shape: f32[128,128], index: 2, kind: input, shape index: {}]
  %s3 = inlined_call_operand.hbm [shape: f32[128,128], index: 3, kind: input, shape index: {}]
  %s4 = inlined_call_operand.vmem [shape: f32[128,1], index: 4, kind: output, shape index: {}]
  %s5 = sld [smem:[#allocation0]]
  $region46: #{tpu_custom_call.1} parent=0
    _
  %s7 = ssub.s32 1, %s5
  %s8 = scalar_select 0, %s7, %s5
  $region1: #{tpu_custom_call.1} parent=0
    #allocation7 [shape = 'u8[65536]{0}', space=vmem, size = 0x10000, scoped, tag = 'input window, operand 3, single buffered']
    #allocation8 [shape = 's32[1]{0}', space=sflag, size = 0x4, scoped, tag = 'scoped memory for tpu_custom_call.1']
    %9 = vsyncpa [#allocation8], 0
    // Predicated region
    $region2: #{tpu_custom_call.1} parent=1 // pred_check
      _
    $region3: #{tpu_custom_call.1} parent=1 // pred_check_branch
      %11 = sbr.rel (0) target = $region5
    $region4: #{tpu_custom_call.1} parent=1 // pred_region
      _
    $region5: #{tpu_custom_call.1} parent=1 // pred_fallthru
      _
    // Predicated region
    $region6: #{tpu_custom_call.1} parent=1 // pred_check
      _
    $region7: #{tpu_custom_call.1} parent=1 // pred_check_branch
      %13 = sbr.rel (0) target = $region9
    $region8: #{tpu_custom_call.1} parent=1 // pred_region
      _
    $region9: #{tpu_custom_call.1} parent=1 // pred_fallthru
      _
    // Predicated region
    $region10: #{tpu_custom_call.1} parent=1 // pred_check
      _
    $region11: #{tpu_custom_call.1} parent=1 // pred_check_branch
      %15 = sbr.rel (0) target = $region13
    $region12: #{tpu_custom_call.1} parent=1 // pred_region
      _
    $region13: #{tpu_custom_call.1} parent=1 // pred_fallthru
      _
    // Predicated region
    $region14: #{tpu_custom_call.1} parent=1 // pred_check
      _
    $region15: #{tpu_custom_call.1} parent=1 // pred_check_branch
      %17 = sbr.rel (0) target = $region17
    $region16: #{tpu_custom_call.1} parent=1 // pred_region
      %s19 = ssub.s32 2048, 2048
      %20 = vsyncadd [#allocation8], %s19
      %s21 = sshll.u32 [#allocation7], 4
      %s22 = int_to_ptr.vmem [resolvable:$true] %s21
      %27 = dma.hbm_to_vmem [thread:$0]  %s3, 2048, %s22, [#allocation8], 128, 128, 8
    $region17: #{tpu_custom_call.1} parent=1 // pred_fallthru
      _
    // Predicated region
    $region18: #{tpu_custom_call.1} parent=1 // pred_check
      _
    $region19: #{tpu_custom_call.1} parent=1 // pred_check_branch
      %29 = sbr.rel (0) target = $region21
    $region20: #{tpu_custom_call.1} parent=1 // pred_region
      %30 = dma.done [#allocation8], 2048
    $region21: #{tpu_custom_call.1} parent=1 // pred_fallthru
      _
    %p31 = scmp.eq.s32.totalorder 0, 0
    // Predicated region
    $region22: #{tpu_custom_call.1} parent=1 // pred_check
      %p32 = pneg %p31
    $region23: #{tpu_custom_call.1} parent=1 // pred_check_branch
      %34 = sbr.rel (%p32) target = $region25
    $region24: #{tpu_custom_call.1} parent=1 // pred_region
      %v35 = vld [vmem:[%s2] sm:$0xff]
      %v36 = vld [vmem:[%s2 + $0x8] sm:$0xff]
      %v37 = vld [vmem:[%s2 + $0x10] sm:$0xff]
      %v38 = vld [vmem:[%s2 + $0x18] sm:$0xff]
      %v39 = vld [vmem:[%s2 + $0x20] sm:$0xff]
      %v40 = vld [vmem:[%s2 + $0x28] sm:$0xff]
      %v41 = vld [vmem:[%s2 + $0x30] sm:$0xff]
      %v42 = vld [vmem:[%s2 + $0x38] sm:$0xff]
      %v43 = vld [vmem:[%s2 + $0x40] sm:$0xff]
      %v44 = vld [vmem:[%s2 + $0x48] sm:$0xff]
      %v45 = vld [vmem:[%s2 + $0x50] sm:$0xff]
      %v46 = vld [vmem:[%s2 + $0x58] sm:$0xff]
      %v47 = vld [vmem:[%s2 + $0x60] sm:$0xff]
      %v48 = vld [vmem:[%s2 + $0x68] sm:$0xff]
      %v49 = vld [vmem:[%s2 + $0x70] sm:$0xff]
      %v50 = vld [vmem:[%s2 + $0x78] sm:$0xff]
      %v51 = vmul.f32 %v35, 14.285714
      %v52 = vmul.f32 %v36, 14.285714
      %v53 = vmul.f32 %v37, 14.285714
      %v54 = vmul.f32 %v38, 14.285714
      %v55 = vmul.f32 %v39, 14.285714
      %v56 = vmul.f32 %v40, 14.285714
      %v57 = vmul.f32 %v41, 14.285714
      %v58 = vmul.f32 %v42, 14.285714
      %v59 = vmul.f32 %v43, 14.285714
      %v60 = vmul.f32 %v44, 14.285714
      %v61 = vmul.f32 %v45, 14.285714
      %v62 = vmul.f32 %v46, 14.285714
      %v63 = vmul.f32 %v47, 14.285714
      %v64 = vmul.f32 %v48, 14.285714
      %v65 = vmul.f32 %v49, 14.285714
      %v66 = vmul.f32 %v50, 14.285714
      %67 = vst [vmem:[#allocation2] sm:$0xff] %v51
      %68 = vst [vmem:[#allocation2 + $0x8] sm:$0xff] %v52
      %69 = vst [vmem:[#allocation2 + $0x10] sm:$0xff] %v53
      %70 = vst [vmem:[#allocation2 + $0x18] sm:$0xff] %v54
      %71 = vst [vmem:[#allocation2 + $0x20] sm:$0xff] %v55
      %72 = vst [vmem:[#allocation2 + $0x28] sm:$0xff] %v56
      %73 = vst [vmem:[#allocation2 + $0x30] sm:$0xff] %v57
      %74 = vst [vmem:[#allocation2 + $0x38] sm:$0xff] %v58
      %75 = vst [vmem:[#allocation2 + $0x40] sm:$0xff] %v59
      %76 = vst [vmem:[#allocation2 + $0x48] sm:$0xff] %v60
      %77 = vst [vmem:[#allocation2 + $0x50] sm:$0xff] %v61
      %78 = vst [vmem:[#allocation2 + $0x58] sm:$0xff] %v62
      %79 = vst [vmem:[#allocation2 + $0x60] sm:$0xff] %v63
      %80 = vst [vmem:[#allocation2 + $0x68] sm:$0xff] %v64
      %81 = vst [vmem:[#allocation2 + $0x70] sm:$0xff] %v65
      %82 = vst [vmem:[#allocation2 + $0x78] sm:$0xff] %v66
      %vm83 = vcmask 7168
      %84 = vst.msk [vmem:[#allocation3] sm:$0xff] %vm83, -1e+30
      %85 = vst.msk [vmem:[#allocation3 + $0x8] sm:$0xff] %vm83, -1e+30
      %86 = vst.msk [vmem:[#allocation3 + $0x10] sm:$0xff] %vm83, -1e+30
      %87 = vst.msk [vmem:[#allocation3 + $0x18] sm:$0xff] %vm83, -1e+30
      %88 = vst.msk [vmem:[#allocation3 + $0x20] sm:$0xff] %vm83, -1e+30
      %89 = vst.msk [vmem:[#allocation3 + $0x28] sm:$0xff] %vm83, -1e+30
      %90 = vst.msk [vmem:[#allocation3 + $0x30] sm:$0xff] %vm83, -1e+30
      %91 = vst.msk [vmem:[#allocation3 + $0x38] sm:$0xff] %vm83, -1e+30
      %92 = vst.msk [vmem:[#allocation3 + $0x40] sm:$0xff] %vm83, -1e+30
      %93 = vst.msk [vmem:[#allocation3 + $0x48] sm:$0xff] %vm83, -1e+30
      %94 = vst.msk [vmem:[#allocation3 + $0x50] sm:$0xff] %vm83, -1e+30
      %95 = vst.msk [vmem:[#allocation3 + $0x58] sm:$0xff] %vm83, -1e+30
      %96 = vst.msk [vmem:[#allocation3 + $0x60] sm:$0xff] %vm83, -1e+30
      %97 = vst.msk [vmem:[#allocation3 + $0x68] sm:$0xff] %vm83, -1e+30
      %98 = vst.msk [vmem:[#allocation3 + $0x70] sm:$0xff] %vm83, -1e+30
      %99 = vst.msk [vmem:[#allocation3 + $0x78] sm:$0xff] %vm83, -1e+30
      %100 = vst.msk [vmem:[#allocation4] sm:$0xff] %vm83, 0.0
      %101 = vst.msk [vmem:[#allocation4 + $0x8] sm:$0xff] %vm83, 0.0
      %102 = vst.msk [vmem:[#allocation4 + $0x10] sm:$0xff] %vm83, 0.0
      %103 = vst.msk [vmem:[#allocation4 + $0x18] sm:$0xff] %vm83, 0.0
      %104 = vst.msk [vmem:[#allocation4 + $0x20] sm:$0xff] %vm83, 0.0
      %105 = vst.msk [vmem:[#allocation4 + $0x28] sm:$0xff] %vm83, 0.0
      %106 = vst.msk [vmem:[#allocation4 + $0x30] sm:$0xff] %vm83, 0.0
      %107 = vst.msk [vmem:[#allocation4 + $0x38] sm:$0xff] %vm83, 0.0
      %108 = vst.msk [vmem:[#allocation4 + $0x40] sm:$0xff] %vm83, 0.0
      %109 = vst.msk [vmem:[#allocation4 + $0x48] sm:$0xff] %vm83, 0.0
      %110 = vst.msk [vmem:[#allocation4 + $0x50] sm:$0xff] %vm83, 0.0
      %111 = vst.msk [vmem:[#allocation4 + $0x58] sm:$0xff] %vm83, 0.0
      %112 = vst.msk [vmem:[#allocation4 + $0x60] sm:$0xff] %vm83, 0.0
      %113 = vst.msk [vmem:[#allocation4 + $0x68] sm:$0xff] %vm83, 0.0
      %114 = vst.msk [vmem:[#allocation4 + $0x70] sm:$0xff] %vm83, 0.0
      %115 = vst.msk [vmem:[#allocation4 + $0x78] sm:$0xff] %vm83, 0.0
      %116 = vst.msk [vmem:[#allocation5] sm:$0xff] %vm83, 0.0
      %117 = vst.msk [vmem:[#allocation5 + $0x8] sm:$0xff] %vm83, 0.0
      %118 = vst.msk [vmem:[#allocation5 + $0x10] sm:$0xff] %vm83, 0.0
      %119 = vst.msk [vmem:[#allocation5 + $0x18] sm:$0xff] %vm83, 0.0
      %120 = vst.msk [vmem:[#allocation5 + $0x20] sm:$0xff] %vm83, 0.0
      %121 = vst.msk [vmem:[#allocation5 + $0x28] sm:$0xff] %vm83, 0.0
      %122 = vst.msk [vmem:[#allocation5 + $0x30] sm:$0xff] %vm83, 0.0
      %123 = vst.msk [vmem:[#allocation5 + $0x38] sm:$0xff] %vm83, 0.0
      %124 = vst.msk [vmem:[#allocation5 + $0x40] sm:$0xff] %vm83, 0.0
      %125 = vst.msk [vmem:[#allocation5 + $0x48] sm:$0xff] %vm83, 0.0
      %126 = vst.msk [vmem:[#allocation5 + $0x50] sm:$0xff] %vm83, 0.0
      %127 = vst.msk [vmem:[#allocation5 + $0x58] sm:$0xff] %vm83, 0.0
      %128 = vst.msk [vmem:[#allocation5 + $0x60] sm:$0xff] %vm83, 0.0
      %129 = vst.msk [vmem:[#allocation5 + $0x68] sm:$0xff] %vm83, 0.0
      %130 = vst.msk [vmem:[#allocation5 + $0x70] sm:$0xff] %vm83, 0.0
      %131 = vst.msk [vmem:[#allocation5 + $0x78] sm:$0xff] %vm83, 0.0
      %132 = vst.msk [vmem:[#allocation6] sm:$0xff] %vm83, 0.0
      %133 = vst.msk [vmem:[#allocation6 + $0x8] sm:$0xff] %vm83, 0.0
      %134 = vst.msk [vmem:[#allocation6 + $0x10] sm:$0xff] %vm83, 0.0
      %135 = vst.msk [vmem:[#allocation6 + $0x18] sm:$0xff] %vm83, 0.0
      %136 = vst.msk [vmem:[#allocation6 + $0x20] sm:$0xff] %vm83, 0.0
      %137 = vst.msk [vmem:[#allocation6 + $0x28] sm:$0xff] %vm83, 0.0
      %138 = vst.msk [vmem:[#allocation6 + $0x30] sm:$0xff] %vm83, 0.0
      %139 = vst.msk [vmem:[#allocation6 + $0x38] sm:$0xff] %vm83, 0.0
      %140 = vst.msk [vmem:[#allocation6 + $0x40] sm:$0xff] %vm83, 0.0
      %141 = vst.msk [vmem:[#allocation6 + $0x48] sm:$0xff] %vm83, 0.0
      %142 = vst.msk [vmem:[#allocation6 + $0x50] sm:$0xff] %vm83, 0.0
      %143 = vst.msk [vmem:[#allocation6 + $0x58] sm:$0xff] %vm83, 0.0
      %144 = vst.msk [vmem:[#allocation6 + $0x60] sm:$0xff] %vm83, 0.0
      %145 = vst.msk [vmem:[#allocation6 + $0x68] sm:$0xff] %vm83, 0.0
      %146 = vst.msk [vmem:[#allocation6 + $0x70] sm:$0xff] %vm83, 0.0
      %147 = vst.msk [vmem:[#allocation6 + $0x78] sm:$0xff] %vm83, 0.0
    $region25: #{tpu_custom_call.1} parent=1 // pred_fallthru
      _
    %v148 = vld [vmem:[#allocation2] sm:$0xff]
    %v149 = vld [vmem:[#allocation2 + $0x8] sm:$0xff]
    %v150 = vld [vmem:[#allocation2 + $0x10] sm:$0xff]
    %v151 = vld [vmem:[#allocation2 + $0x18] sm:$0xff]
    %v152 = vld [vmem:[#allocation2 + $0x20] sm:$0xff]
    %v153 = vld [vmem:[#allocation2 + $0x28] sm:$0xff]
    %v154 = vld [vmem:[#allocation2 + $0x30] sm:$0xff]
    %v155 = vld [vmem:[#allocation2 + $0x38] sm:$0xff]
    %v156 = vld [vmem:[#allocation2 + $0x40] sm:$0xff]
    %v157 = vld [vmem:[#allocation2 + $0x48] sm:$0xff]
    %v158 = vld [vmem:[#allocation2 + $0x50] sm:$0xff]
    %v159 = vld [vmem:[#allocation2 + $0x58] sm:$0xff]
    %v160 = vld [vmem:[#allocation2 + $0x60] sm:$0xff]
    %v161 = vld [vmem:[#allocation2 + $0x68] sm:$0xff]
    %v162 = vld [vmem:[#allocation2 + $0x70] sm:$0xff]
    %v163 = vld [vmem:[#allocation2 + $0x78] sm:$0xff]
    %v164 = vld [vmem:[#allocation7] sm:$0xff]
    %v165 = vld [vmem:[#allocation7 + $0x8] sm:$0xff]
    %v166 = vld [vmem:[#allocation7 + $0x10] sm:$0xff]
    %v167 = vld [vmem:[#allocation7 + $0x18] sm:$0xff]
    %v168 = vld [vmem:[#allocation7 + $0x20] sm:$0xff]
    %v169 = vld [vmem:[#allocation7 + $0x28] sm:$0xff]
    %v170 = vld [vmem:[#allocation7 + $0x30] sm:$0xff]
    %v171 = vld [vmem:[#allocation7 + $0x38] sm:$0xff]
    %v172 = vld [vmem:[#allocation7 + $0x40] sm:$0xff]
    %v173 = vld [vmem:[#allocation7 + $0x48] sm:$0xff]
    %v174 = vld [vmem:[#allocation7 + $0x50] sm:$0xff]
    %v175 = vld [vmem:[#allocation7 + $0x58] sm:$0xff]
    %v176 = vld [vmem:[#allocation7 + $0x60] sm:$0xff]
    %v177 = vld [vmem:[#allocation7 + $0x68] sm:$0xff]
    %v178 = vld [vmem:[#allocation7 + $0x70] sm:$0xff]
    %v179 = vld [vmem:[#allocation7 + $0x78] sm:$0xff]
    %180 = vmatprep.subr.mxu0 0.0
    %181 = vmatpush1.xpose.msra.mxu0 %v179
    %182 = vmatprep.subr.mxu0 0.0
    %183 = vmatpush1.xpose.msra.mxu0 %v178
    %184 = vmatprep.subr.mxu0 0.0
    %185 = vmatpush1.xpose.msra.mxu0 %v177
    %186 = vmatprep.subr.mxu0 0.0
    %187 = vmatpush1.xpose.msra.mxu0 %v176
    %188 = vmatprep.subr.mxu0 0.0
    %189 = vmatpush1.xpose.msra.mxu0 %v175
    %190 = vmatprep.subr.mxu0 0.0
    %191 = vmatpush1.xpose.msra.mxu0 %v174
    %192 = vmatprep.subr.mxu0 0.0
    %193 = vmatpush1.xpose.msra.mxu0 %v173
    %194 = vmatprep.subr.mxu0 0.0
    %195 = vmatpush1.xpose.msra.mxu0 %v172
    %196 = vmatprep.subr.mxu0 0.0
    %197 = vmatpush1.xpose.msra.mxu0 %v171
    %198 = vmatprep.subr.mxu0 0.0
    %199 = vmatpush1.xpose.msra.mxu0 %v170
    %200 = vmatprep.subr.mxu0 0.0
    %201 = vmatpush1.xpose.msra.mxu0 %v169
    %202 = vmatprep.subr.mxu0 0.0
    %203 = vmatpush1.xpose.msra.mxu0 %v168
    %204 = vmatprep.subr.mxu0 0.0
    %205 = vmatpush1.xpose.msra.mxu0 %v167
    %206 = vmatprep.subr.mxu0 0.0
    %207 = vmatpush1.xpose.msra.mxu0 %v166
    %208 = vmatprep.subr.mxu0 0.0
    %209 = vmatpush1.xpose.msra.mxu0 %v165
    %210 = vmatprep.subr.mxu0 0.0
    %211 = vmatpush1.xpose.msra.mxu0 %v164
    %212 = vmatprep.subr.mxu0 0.0
    %213 = vmatpush2.xpose.msra.mxu0 0.0
    %214 = vmatprep.subr.mxu0 0.0
    %215 = vmatpush2.xpose.msra.mxu0 0.0
    %216 = vmatprep.subr.mxu0 0.0
    %217 = vmatpush2.xpose.msra.mxu0 0.0
    %218 = vmatprep.subr.mxu0 0.0
    %219 = vmatpush2.xpose.msra.mxu0 0.0
    %220 = vmatprep.subr.mxu0 0.0
    %221 = vmatpush2.xpose.msra.mxu0 0.0
    %222 = vmatprep.subr.mxu0 0.0
    %223 = vmatpush2.xpose.msra.mxu0 0.0
    %224 = vmatprep.subr.mxu0 0.0
    %225 = vmatpush2.xpose.msra.mxu0 0.0
    %226 = vmatprep.subr.mxu0 0.0
    %227 = vmatpush2.xpose.msra.mxu0 0.0
    %228 = vmatprep.subr.mxu0 0.0
    %229 = vmatpush2.xpose.msra.mxu0 0.0
    %230 = vmatprep.subr.mxu0 0.0
    %231 = vmatpush2.xpose.msra.mxu0 0.0
    %232 = vmatprep.subr.mxu0 0.0
    %233 = vmatpush2.xpose.msra.mxu0 0.0
    %234 = vmatprep.subr.mxu0 0.0
    %235 = vmatpush2.xpose.msra.mxu0 0.0
    %236 = vmatprep.subr.mxu0 0.0
    %237 = vmatpush2.xpose.msra.mxu0 0.0
    %238 = vmatprep.subr.mxu0 0.0
    %239 = vmatpush2.xpose.msra.mxu0 0.0
    %240 = vmatprep.subr.mxu0 0.0
    %241 = vmatpush2.xpose.msra.mxu0 0.0
    %242 = vmatprep.subr.mxu0 0.0
    %243 = vmatpush2.xpose.msra.mxu0 0.0
    %244 = vmatprep.mubr.f32.mxu0 0.0
    %245 = vmatmul.mubr.f32.gmra.mxu0 %v148
    %v246 = vpop.f32.mrf.mxu0
    %v247 = vadd.f32 0.0, %v246
    %v248 = vpop.f32.mrf.mxu0
    %249 = vmatprep.mubr.f32.mxu0 0.0
    %250 = vmatmul.mubr.f32.gmra.mxu0 %v149
    %v251 = vpop.f32.mrf.mxu0
    %v252 = vadd.f32 0.0, %v251
    %v253 = vpop.f32.mrf.mxu0
    %254 = vmatprep.mubr.f32.mxu0 0.0
    %255 = vmatmul.mubr.f32.gmra.mxu0 %v150
    %v256 = vpop.f32.mrf.mxu0
    %v257 = vadd.f32 0.0, %v256
    %v258 = vpop.f32.mrf.mxu0
    %259 = vmatprep.mubr.f32.mxu0 0.0
    %260 = vmatmul.mubr.f32.gmra.mxu0 %v151
    %v261 = vpop.f32.mrf.mxu0
    %v262 = vadd.f32 0.0, %v261
    %v263 = vpop.f32.mrf.mxu0
    %264 = vmatprep.mubr.f32.mxu0 0.0
    %265 = vmatmul.mubr.f32.gmra.mxu0 %v152
    %v266 = vpop.f32.mrf.mxu0
    %v267 = vadd.f32 0.0, %v266
    %v268 = vpop.f32.mrf.mxu0
    %269 = vmatprep.mubr.f32.mxu0 0.0
    %270 = vmatmul.mubr.f32.gmra.mxu0 %v153
    %v271 = vpop.f32.mrf.mxu0
    %v272 = vadd.f32 0.0, %v271
    %v273 = vpop.f32.mrf.mxu0
    %274 = vmatprep.mubr.f32.mxu0 0.0
    %275 = vmatmul.mubr.f32.gmra.mxu0 %v154
    %v276 = vpop.f32.mrf.mxu0
    %v277 = vadd.f32 0.0, %v276
    %v278 = vpop.f32.mrf.mxu0
    %279 = vmatprep.mubr.f32.mxu0 0.0
    %280 = vmatmul.mubr.f32.gmra.mxu0 %v155
    %v281 = vpop.f32.mrf.mxu0
    %v282 = vadd.f32 0.0, %v281
    %v283 = vpop.f32.mrf.mxu0
    %284 = vmatprep.mubr.f32.mxu0 0.0
    %285 = vmatmul.mubr.f32.gmra.mxu0 %v156
    %v286 = vpop.f32.mrf.mxu0
    %v287 = vadd.f32 0.0, %v286
    %v288 = vpop.f32.mrf.mxu0
    %289 = vmatprep.mubr.f32.mxu0 0.0
    %290 = vmatmul.mubr.f32.gmra.mxu0 %v157
    %v291 = vpop.f32.mrf.mxu0
    %v292 = vadd.f32 0.0, %v291
    %v293 = vpop.f32.mrf.mxu0
    %294 = vmatprep.mubr.f32.mxu0 0.0
    %295 = vmatmul.mubr.f32.gmra.mxu0 %v158
    %v296 = vpop.f32.mrf.mxu0
    %v297 = vadd.f32 0.0, %v296
    %v298 = vpop.f32.mrf.mxu0
    %299 = vmatprep.mubr.f32.mxu0 0.0
    %300 = vmatmul.mubr.f32.gmra.mxu0 %v159
    %v301 = vpop.f32.mrf.mxu0
    %v302 = vadd.f32 0.0, %v301
    %v303 = vpop.f32.mrf.mxu0
    %304 = vmatprep.mubr.f32.mxu0 0.0
    %305 = vmatmul.mubr.f32.gmra.mxu0 %v160
    %v306 = vpop.f32.mrf.mxu0
    %v307 = vadd.f32 0.0, %v306
    %v308 = vpop.f32.mrf.mxu0
    %309 = vmatprep.mubr.f32.mxu0 0.0
    %310 = vmatmul.mubr.f32.gmra.mxu0 %v161
    %v311 = vpop.f32.mrf.mxu0
    %v312 = vadd.f32 0.0, %v311
    %v313 = vpop.f32.mrf.mxu0
    %314 = vmatprep.mubr.f32.mxu0 0.0
    %315 = vmatmul.mubr.f32.gmra.mxu0 %v162
    %v316 = vpop.f32.mrf.mxu0
    %v317 = vadd.f32 0.0, %v316
    %v318 = vpop.f32.mrf.mxu0
    %319 = vmatprep.mubr.f32.mxu0 0.0
    %320 = vmatmul.mubr.f32.gmra.mxu0 %v163
    %v321 = vpop.f32.mrf.mxu0
    %v322 = vadd.f32 0.0, %v321
    %v323 = vpop.f32.mrf.mxu0
    %324 = vdwg.mxu0
    %v325 = vld [vmem:[%s0] sm:$0xff]
    %v326 = vld [vmem:[%s0 + $0x8] sm:$0xff]
    %v327 = vld [vmem:[%s0 + $0x10] sm:$0xff]
    %v328 = vld [vmem:[%s0 + $0x18] sm:$0xff]
    %v329 = vld [vmem:[%s0 + $0x20] sm:$0xff]
    %v330 = vld [vmem:[%s0 + $0x28] sm:$0xff]
    %v331 = vld [vmem:[%s0 + $0x30] sm:$0xff]
    %v332 = vld [vmem:[%s0 + $0x38] sm:$0xff]
    %v333 = vld [vmem:[%s0 + $0x40] sm:$0xff]
    %v334 = vld [vmem:[%s0 + $0x48] sm:$0xff]
    %v335 = vld [vmem:[%s0 + $0x50] sm:$0xff]
    %v336 = vld [vmem:[%s0 + $0x58] sm:$0xff]
    %v337 = vld [vmem:[%s0 + $0x60] sm:$0xff]
    %v338 = vld [vmem:[%s0 + $0x68] sm:$0xff]
    %v339 = vld [vmem:[%s0 + $0x70] sm:$0xff]
    %v340 = vld [vmem:[%s0 + $0x78] sm:$0xff]
    %v341 = vld [vmem:[%s1] sm:$0x1]
    %342 = vset.pattern.permute.xlu0 0
    %343 = vperm.xlu0 %342, %v325
    %v344 = vpop.permute.xlu0 %343
    %345 = vset.pattern.permute.xlu0 0
    %346 = vperm.xlu0 %345, %v326
    %v347 = vpop.permute.xlu0 %346
    %348 = vset.pattern.permute.xlu0 0
    %349 = vperm.xlu0 %348, %v327
    %v350 = vpop.permute.xlu0 %349
    %351 = vset.pattern.permute.xlu0 0
    %352 = vperm.xlu0 %351, %v328
    %v353 = vpop.permute.xlu0 %352
    %354 = vset.pattern.permute.xlu0 0
    %355 = vperm.xlu0 %354, %v329
    %v356 = vpop.permute.xlu0 %355
    %357 = vset.pattern.permute.xlu0 0
    %358 = vperm.xlu0 %357, %v330
    %v359 = vpop.permute.xlu0 %358
    %360 = vset.pattern.permute.xlu0 0
    %361 = vperm.xlu0 %360, %v331
    %v362 = vpop.permute.xlu0 %361
    %363 = vset.pattern.permute.xlu0 0
    %364 = vperm.xlu0 %363, %v332
    %v365 = vpop.permute.xlu0 %364
    %366 = vset.pattern.permute.xlu0 0
    %367 = vperm.xlu0 %366, %v333
    %v368 = vpop.permute.xlu0 %367
    %369 = vset.pattern.permute.xlu0 0
    %370 = vperm.xlu0 %369, %v334
    %v371 = vpop.permute.xlu0 %370
    %372 = vset.pattern.permute.xlu0 0
    %373 = vperm.xlu0 %372, %v335
    %v374 = vpop.permute.xlu0 %373
    %375 = vset.pattern.permute.xlu0 0
    %376 = vperm.xlu0 %375, %v336
    %v377 = vpop.permute.xlu0 %376
    %378 = vset.pattern.permute.xlu0 0
    %379 = vperm.xlu0 %378, %v337
    %v380 = vpop.permute.xlu0 %379
    %381 = vset.pattern.permute.xlu0 0
    %382 = vperm.xlu0 %381, %v338
    %v383 = vpop.permute.xlu0 %382
    %384 = vset.pattern.permute.xlu0 0
    %385 = vperm.xlu0 %384, %v339
    %v386 = vpop.permute.xlu0 %385
    %387 = vset.pattern.permute.xlu0 0
    %388 = vperm.xlu0 %387, %v340
    %v389 = vpop.permute.xlu0 %388
    %v390 = vlaneseq
    %v391 = vshrl.u32 %v390, 7
    %v392 = vsub.s32 0, %v391
    %v393 = vrot.slane %v341, %v392
    %vm394 = vcmp.eq.s32.totalorder %v344, %v393
    %vm395 = vcmp.eq.s32.totalorder %v347, %v393
    %vm396 = vcmp.eq.s32.totalorder %v350, %v393
    %vm397 = vcmp.eq.s32.totalorder %v353, %v393
    %vm398 = vcmp.eq.s32.totalorder %v356, %v393
    %vm399 = vcmp.eq.s32.totalorder %v359, %v393
    %vm400 = vcmp.eq.s32.totalorder %v362, %v393
    %vm401 = vcmp.eq.s32.totalorder %v365, %v393
    %vm402 = vcmp.eq.s32.totalorder %v368, %v393
    %vm403 = vcmp.eq.s32.totalorder %v371, %v393
    %vm404 = vcmp.eq.s32.totalorder %v374, %v393
    %vm405 = vcmp.eq.s32.totalorder %v377, %v393
    %vm406 = vcmp.eq.s32.totalorder %v380, %v393
    %vm407 = vcmp.eq.s32.totalorder %v383, %v393
    %vm408 = vcmp.eq.s32.totalorder %v386, %v393
    %vm409 = vcmp.eq.s32.totalorder %v389, %v393
    %s410 = smul.u32 0, 128
    %s411 = sadd.s32 0, 1
    %s412 = smul.u32 %s411, 128
    %p413 = scmp.lt.s32.totalorder %s410, %s412
    %s414 = smul.u32 0, 128
    %s415 = sadd.s32 0, 1
    %s416 = smul.u32 %s415, 128
    %p417 = scmp.lt.s32.totalorder %s414, %s416
    %p418 = pnand %p413, %p417
    %p419 = pneg %p418
    %p420 = por %p419, %p31
    // Predicated region
    $region26: #{tpu_custom_call.1} parent=1 // pred_check
      %p421 = pneg %p420
    $region27: #{tpu_custom_call.1} parent=1 // pred_check_branch
      %423 = sbr.rel (%p421) target = $region29
    $region28: #{tpu_custom_call.1} parent=1 // pred_region
      %v424 = vlaneseq
      %v425 = vshrl.u32 %v424, 7
      %v426 = vadd.s32 %v425, 8
      %v427 = vadd.s32 %v425, 16
      %v428 = vadd.s32 %v425, 24
      %v429 = vadd.s32 %v425, 32
      %v430 = vadd.s32 %v425, 40
      %v431 = vadd.s32 %v425, 48
      %v432 = vadd.s32 %v425, 56
      %v433 = vadd.s32 %v425, 64
      %v434 = vadd.s32 %v425, 72
      %v435 = vadd.s32 %v425, 80
      %v436 = vadd.s32 %v425, 88
      %v437 = vadd.s32 %v425, 96
      %v438 = vadd.s32 %v425, 104
      %v439 = vadd.s32 %v425, 112
      %v440 = vadd.s32 %v425, 120
      %v441 = vstv %s410
      %v442 = vadd.s32 %v425, %v441
      %v443 = vadd.s32 %v426, %v441
      %v444 = vadd.s32 %v427, %v441
      %v445 = vadd.s32 %v428, %v441
      %v446 = vadd.s32 %v429, %v441
      %v447 = vadd.s32 %v430, %v441
      %v448 = vadd.s32 %v431, %v441
      %v449 = vadd.s32 %v432, %v441
      %v450 = vadd.s32 %v433, %v441
      %v451 = vadd.s32 %v434, %v441
      %v452 = vadd.s32 %v435, %v441
      %v453 = vadd.s32 %v436, %v441
      %v454 = vadd.s32 %v437, %v441
      %v455 = vadd.s32 %v438, %v441
      %v456 = vadd.s32 %v439, %v441
      %v457 = vadd.s32 %v440, %v441
      %v458 = vlaneseq
      %v459 = vand.u32 %v458, 127
      %v460 = vstv %s414
      %v461 = vadd.s32 %v459, %v460
      %vm462 = vcmp.ne.s32.totalorder %v442, %v461
      %vm463 = vcmp.ne.s32.totalorder %v443, %v461
      %vm464 = vcmp.ne.s32.totalorder %v444, %v461
      %vm465 = vcmp.ne.s32.totalorder %v445, %v461
      %vm466 = vcmp.ne.s32.totalorder %v446, %v461
      %vm467 = vcmp.ne.s32.totalorder %v447, %v461
      %vm468 = vcmp.ne.s32.totalorder %v448, %v461
      %vm469 = vcmp.ne.s32.totalorder %v449, %v461
      %vm470 = vcmp.ne.s32.totalorder %v450, %v461
      %vm471 = vcmp.ne.s32.totalorder %v451, %v461
      %vm472 = vcmp.ne.s32.totalorder %v452, %v461
      %vm473 = vcmp.ne.s32.totalorder %v453, %v461
      %vm474 = vcmp.ne.s32.totalorder %v454, %v461
      %vm475 = vcmp.ne.s32.totalorder %v455, %v461
      %vm476 = vcmp.ne.s32.totalorder %v456, %v461
      %vm477 = vcmp.ne.s32.totalorder %v457, %v461
      %vm478 = vcmp.lt.s32.totalorder %v461, 16
      %v479 = vsel %vm478, 1, 0
      %vm480 = vcmp.eq.s32.totalorder %v479, 1
      %vm481 = vmand %vm462, %vm480
      %vm482 = vmand %vm463, %vm480
      %vm483 = vmand %vm464, %vm480
      %vm484 = vmand %vm465, %vm480
      %vm485 = vmand %vm466, %vm480
      %vm486 = vmand %vm467, %vm480
      %vm487 = vmand %vm468, %vm480
      %vm488 = vmand %vm469, %vm480
      %vm489 = vmand %vm470, %vm480
      %vm490 = vmand %vm471, %vm480
      %vm491 = vmand %vm472, %vm480
      %vm492 = vmand %vm473, %vm480
      %vm493 = vmand %vm474, %vm480
      %vm494 = vmand %vm475, %vm480
      %vm495 = vmand %vm476, %vm480
      %vm496 = vmand %vm477, %vm480
      %vm497 = vmand %vm481, %vm394
      %vm498 = vmand %vm482, %vm395
      %vm499 = vmand %vm483, %vm396
      %vm500 = vmand %vm484, %vm397
      %vm501 = vmand %vm485, %vm398
      %vm502 = vmand %vm486, %vm399
      %vm503 = vmand %vm487, %vm400
      %vm504 = vmand %vm488, %vm401
      %vm505 = vmand %vm489, %vm402
      %vm506 = vmand %vm490, %vm403
      %vm507 = vmand %vm491, %vm404
      %vm508 = vmand %vm492, %vm405
      %vm509 = vmand %vm493, %vm406
      %vm510 = vmand %vm494, %vm407
      %vm511 = vmand %vm495, %vm408
      %vm512 = vmand %vm496, %vm409
      %v513 = vsel %vm481, %v247, -1e+30
      %v514 = vsel %vm482, %v252, -1e+30
      %v515 = vsel %vm483, %v257, -1e+30
      %v516 = vsel %vm484, %v262, -1e+30
      %v517 = vsel %vm485, %v267, -1e+30
      %v518 = vsel %vm486, %v272, -1e+30
      %v519 = vsel %vm487, %v277, -1e+30
      %v520 = vsel %vm488, %v282, -1e+30
      %v521 = vsel %vm489, %v287, -1e+30
      %v522 = vsel %vm490, %v292, -1e+30
      %v523 = vsel %vm491, %v297, -1e+30
      %v524 = vsel %vm492, %v302, -1e+30
      %v525 = vsel %vm493, %v307, -1e+30
      %v526 = vsel %vm494, %v312, -1e+30
      %v527 = vsel %vm495, %v317, -1e+30
      %v528 = vsel %vm496, %v322, -1e+30
      %v529 = vsel %vm497, 1, 0
      %v530 = vsel %vm498, 1, 0
      %v531 = vsel %vm499, 1, 0
      %v532 = vsel %vm500, 1, 0
      %v533 = vsel %vm501, 1, 0
      %v534 = vsel %vm502, 1, 0
      %v535 = vsel %vm503, 1, 0
      %v536 = vsel %vm504, 1, 0
      %v537 = vsel %vm505, 1, 0
      %v538 = vsel %vm506, 1, 0
      %v539 = vsel %vm507, 1, 0
      %v540 = vsel %vm508, 1, 0
      %v541 = vsel %vm509, 1, 0
      %v542 = vsel %vm510, 1, 0
      %v543 = vsel %vm511, 1, 0
      %v544 = vsel %vm512, 1, 0
      %v545 = vcvt.s32.f32 %v529
      %v546 = vcvt.s32.f32 %v530
      %v547 = vcvt.s32.f32 %v531
      %v548 = vcvt.s32.f32 %v532
      %v549 = vcvt.s32.f32 %v533
      %v550 = vcvt.s32.f32 %v534
      %v551 = vcvt.s32.f32 %v535
      %v552 = vcvt.s32.f32 %v536
      %v553 = vcvt.s32.f32 %v537
      %v554 = vcvt.s32.f32 %v538
      %v555 = vcvt.s32.f32 %v539
      %v556 = vcvt.s32.f32 %v540
      %v557 = vcvt.s32.f32 %v541
      %v558 = vcvt.s32.f32 %v542
      %v559 = vcvt.s32.f32 %v543
      %v560 = vcvt.s32.f32 %v544
      %v561 = vld [vmem:[#allocation3] sm:$0xff]
      %v562 = vld [vmem:[#allocation3 + $0x8] sm:$0xff]
      %v563 = vld [vmem:[#allocation3 + $0x10] sm:$0xff]
      %v564 = vld [vmem:[#allocation3 + $0x18] sm:$0xff]
      %v565 = vld [vmem:[#allocation3 + $0x20] sm:$0xff]
      %v566 = vld [vmem:[#allocation3 + $0x28] sm:$0xff]
      %v567 = vld [vmem:[#allocation3 + $0x30] sm:$0xff]
      %v568 = vld [vmem:[#allocation3 + $0x38] sm:$0xff]
      %v569 = vld [vmem:[#allocation3 + $0x40] sm:$0xff]
      %v570 = vld [vmem:[#allocation3 + $0x48] sm:$0xff]
      %v571 = vld [vmem:[#allocation3 + $0x50] sm:$0xff]
      %v572 = vld [vmem:[#allocation3 + $0x58] sm:$0xff]
      %v573 = vld [vmem:[#allocation3 + $0x60] sm:$0xff]
      %v574 = vld [vmem:[#allocation3 + $0x68] sm:$0xff]
      %v575 = vld [vmem:[#allocation3 + $0x70] sm:$0xff]
      %v576 = vld [vmem:[#allocation3 + $0x78] sm:$0xff]
      %577 = vmax.xlane.f32.xlu0 %v513
      %v578 = vpop.xlane.xlu0 %577
      %579 = vmax.xlane.f32.xlu0 %v514
      %v580 = vpop.xlane.xlu0 %579
      %581 = vmax.xlane.f32.xlu0 %v515
      %v582 = vpop.xlane.xlu0 %581
      %583 = vmax.xlane.f32.xlu0 %v516
      %v584 = vpop.xlane.xlu0 %583
      %585 = vmax.xlane.f32.xlu0 %v517
      %v586 = vpop.xlane.xlu0 %585
      %587 = vmax.xlane.f32.xlu0 %v518
      %v588 = vpop.xlane.xlu0 %587
      %589 = vmax.xlane.f32.xlu0 %v519
      %v590 = vpop.xlane.xlu0 %589
      %591 = vmax.xlane.f32.xlu0 %v520
      %v592 = vpop.xlane.xlu0 %591
      %593 = vmax.xlane.f32.xlu0 %v521
      %v594 = vpop.xlane.xlu0 %593
      %595 = vmax.xlane.f32.xlu0 %v522
      %v596 = vpop.xlane.xlu0 %595
      %597 = vmax.xlane.f32.xlu0 %v523
      %v598 = vpop.xlane.xlu0 %597
      %599 = vmax.xlane.f32.xlu0 %v524
      %v600 = vpop.xlane.xlu0 %599
      %601 = vmax.xlane.f32.xlu0 %v525
      %v602 = vpop.xlane.xlu0 %601
      %603 = vmax.xlane.f32.xlu0 %v526
      %v604 = vpop.xlane.xlu0 %603
      %605 = vmax.xlane.f32.xlu0 %v527
      %v606 = vpop.xlane.xlu0 %605
      %607 = vmax.xlane.f32.xlu0 %v528
      %v608 = vpop.xlane.xlu0 %607
      %v609 = vmax.f32 %v561, %v578
      %v610 = vmax.f32 %v562, %v580
      %v611 = vmax.f32 %v563, %v582
      %v612 = vmax.f32 %v564, %v584
      %v613 = vmax.f32 %v565, %v586
      %v614 = vmax.f32 %v566, %v588
      %v615 = vmax.f32 %v567, %v590
      %v616 = vmax.f32 %v568, %v592
      %v617 = vmax.f32 %v569, %v594
      %v618 = vmax.f32 %v570, %v596
      %v619 = vmax.f32 %v571, %v598
      %v620 = vmax.f32 %v572, %v600
      %v621 = vmax.f32 %v573, %v602
      %v622 = vmax.f32 %v574, %v604
      %v623 = vmax.f32 %v575, %v606
      %v624 = vmax.f32 %v576, %v608
      %v625 = vsub.f32 %v561, %v609
      %v626 = vsub.f32 %v562, %v610
      %v627 = vsub.f32 %v563, %v611
      %v628 = vsub.f32 %v564, %v612
      %v629 = vsub.f32 %v565, %v613
      %v630 = vsub.f32 %v566, %v614
      %v631 = vsub.f32 %v567, %v615
      %v632 = vsub.f32 %v568, %v616
      %v633 = vsub.f32 %v569, %v617
      %v634 = vsub.f32 %v570, %v618
      %v635 = vsub.f32 %v571, %v619
      %v636 = vsub.f32 %v572, %v620
      %v637 = vsub.f32 %v573, %v621
      %v638 = vsub.f32 %v574, %v622
      %v639 = vsub.f32 %v575, %v623
      %v640 = vsub.f32 %v576, %v624
      %v641 = vmul.f32 %v625, 1.442695
      %v642 = vpow.pop %v641
      %v643 = vmul.f32 %v626, 1.442695
      %v644 = vpow.pop %v643
      %v645 = vmul.f32 %v627, 1.442695
      %v646 = vpow.pop %v645
      %v647 = vmul.f32 %v628, 1.442695
      %v648 = vpow.pop %v647
      %v649 = vmul.f32 %v629, 1.442695
      %v650 = vpow.pop %v649
      %v651 = vmul.f32 %v630, 1.442695
      %v652 = vpow.pop %v651
      %v653 = vmul.f32 %v631, 1.442695
      %v654 = vpow.pop %v653
      %v655 = vmul.f32 %v632, 1.442695
      %v656 = vpow.pop %v655
      %v657 = vmul.f32 %v633, 1.442695
      %v658 = vpow.pop %v657
      %v659 = vmul.f32 %v634, 1.442695
      %v660 = vpow.pop %v659
      %v661 = vmul.f32 %v635, 1.442695
      %v662 = vpow.pop %v661
      %v663 = vmul.f32 %v636, 1.442695
      %v664 = vpow.pop %v663
      %v665 = vmul.f32 %v637, 1.442695
      %v666 = vpow.pop %v665
      %v667 = vmul.f32 %v638, 1.442695
      %v668 = vpow.pop %v667
      %v669 = vmul.f32 %v639, 1.442695
      %v670 = vpow.pop %v669
      %v671 = vmul.f32 %v640, 1.442695
      %v672 = vpow.pop %v671
      %674 = vset.pattern.permute.xlu0 0
      %675 = vperm.xlu0 %674, %v609
      %v676 = vpop.permute.xlu0 %675
      %679 = vset.pattern.permute.xlu0 0
      %680 = vperm.xlu0 %679, %v610
      %v681 = vpop.permute.xlu0 %680
      %684 = vset.pattern.permute.xlu0 0
      %685 = vperm.xlu0 %684, %v611
      %v686 = vpop.permute.xlu0 %685
      %689 = vset.pattern.permute.xlu0 0
      %690 = vperm.xlu0 %689, %v612
      %v691 = vpop.permute.xlu0 %690
      %694 = vset.pattern.permute.xlu0 0
      %695 = vperm.xlu0 %694, %v613
      %v696 = vpop.permute.xlu0 %695
      %699 = vset.pattern.permute.xlu0 0
      %700 = vperm.xlu0 %699, %v614
      %v701 = vpop.permute.xlu0 %700
      %704 = vset.pattern.permute.xlu0 0
      %705 = vperm.xlu0 %704, %v615
      %v706 = vpop.permute.xlu0 %705
      %709 = vset.pattern.permute.xlu0 0
      %710 = vperm.xlu0 %709, %v616
      %v711 = vpop.permute.xlu0 %710
      %714 = vset.pattern.permute.xlu0 0
      %715 = vperm.xlu0 %714, %v617
      %v716 = vpop.permute.xlu0 %715
      %719 = vset.pattern.permute.xlu0 0
      %720 = vperm.xlu0 %719, %v618
      %v721 = vpop.permute.xlu0 %720
      %724 = vset.pattern.permute.xlu0 0
      %725 = vperm.xlu0 %724, %v619
      %v726 = vpop.permute.xlu0 %725
      %729 = vset.pattern.permute.xlu0 0
      %730 = vperm.xlu0 %729, %v620
      %v731 = vpop.permute.xlu0 %730
      %734 = vset.pattern.permute.xlu0 0
      %735 = vperm.xlu0 %734, %v621
      %v736 = vpop.permute.xlu0 %735
      %739 = vset.pattern.permute.xlu0 0
      %740 = vperm.xlu0 %739, %v622
      %v741 = vpop.permute.xlu0 %740
      %744 = vset.pattern.permute.xlu0 0
      %745 = vperm.xlu0 %744, %v623
      %v746 = vpop.permute.xlu0 %745
      %749 = vset.pattern.permute.xlu0 0
      %750 = vperm.xlu0 %749, %v624
      %v751 = vpop.permute.xlu0 %750
      %v753 = vsub.f32 %v513, %v676
      %v754 = vsub.f32 %v514, %v681
      %v755 = vsub.f32 %v515, %v686
      %v756 = vsub.f32 %v516, %v691
      %v757 = vsub.f32 %v517, %v696
      %v758 = vsub.f32 %v518, %v701
      %v759 = vsub.f32 %v519, %v706
      %v760 = vsub.f32 %v520, %v711
      %v761 = vsub.f32 %v521, %v716
      %v762 = vsub.f32 %v522, %v721
      %v763 = vsub.f32 %v523, %v726
      %v764 = vsub.f32 %v524, %v731
      %v765 = vsub.f32 %v525, %v736
      %v766 = vsub.f32 %v526, %v741
      %v767 = vsub.f32 %v527, %v746
      %v768 = vsub.f32 %v528, %v751
      %v769 = vmul.f32 %v753, 1.442695
      %v770 = vpow.pop %v769
      %v771 = vmul.f32 %v754, 1.442695
      %v772 = vpow.pop %v771
      %v773 = vmul.f32 %v755, 1.442695
      %v774 = vpow.pop %v773
      %v775 = vmul.f32 %v756, 1.442695
      %v776 = vpow.pop %v775
      %v777 = vmul.f32 %v757, 1.442695
      %v778 = vpow.pop %v777
      %v779 = vmul.f32 %v758, 1.442695
      %v780 = vpow.pop %v779
      %v781 = vmul.f32 %v759, 1.442695
      %v782 = vpow.pop %v781
      %v783 = vmul.f32 %v760, 1.442695
      %v784 = vpow.pop %v783
      %v785 = vmul.f32 %v761, 1.442695
      %v786 = vpow.pop %v785
      %v787 = vmul.f32 %v762, 1.442695
      %v788 = vpow.pop %v787
      %v789 = vmul.f32 %v763, 1.442695
      %v790 = vpow.pop %v789
      %v791 = vmul.f32 %v764, 1.442695
      %v792 = vpow.pop %v791
      %v793 = vmul.f32 %v765, 1.442695
      %v794 = vpow.pop %v793
      %v795 = vmul.f32 %v766, 1.442695
      %v796 = vpow.pop %v795
      %v797 = vmul.f32 %v767, 1.442695
      %v798 = vpow.pop %v797
      %v799 = vmul.f32 %v768, 1.442695
      %v800 = vpow.pop %v799
      %v801 = vld [vmem:[#allocation4] sm:$0xff]
      %v802 = vld [vmem:[#allocation4 + $0x8] sm:$0xff]
      %v803 = vld [vmem:[#allocation4 + $0x10] sm:$0xff]
      %v804 = vld [vmem:[#allocation4 + $0x18] sm:$0xff]
      %v805 = vld [vmem:[#allocation4 + $0x20] sm:$0xff]
      %v806 = vld [vmem:[#allocation4 + $0x28] sm:$0xff]
      %v807 = vld [vmem:[#allocation4 + $0x30] sm:$0xff]
      %v808 = vld [vmem:[#allocation4 + $0x38] sm:$0xff]
      %v809 = vld [vmem:[#allocation4 + $0x40] sm:$0xff]
      %v810 = vld [vmem:[#allocation4 + $0x48] sm:$0xff]
      %v811 = vld [vmem:[#allocation4 + $0x50] sm:$0xff]
      %v812 = vld [vmem:[#allocation4 + $0x58] sm:$0xff]
      %v813 = vld [vmem:[#allocation4 + $0x60] sm:$0xff]
      %v814 = vld [vmem:[#allocation4 + $0x68] sm:$0xff]
      %v815 = vld [vmem:[#allocation4 + $0x70] sm:$0xff]
      %v816 = vld [vmem:[#allocation4 + $0x78] sm:$0xff]
      %v817 = vmul.f32 %v642, %v801
      %v818 = vmul.f32 %v644, %v802
      %v819 = vmul.f32 %v646, %v803
      %v820 = vmul.f32 %v648, %v804
      %v821 = vmul.f32 %v650, %v805
      %v822 = vmul.f32 %v652, %v806
      %v823 = vmul.f32 %v654, %v807
      %v824 = vmul.f32 %v656, %v808
      %v825 = vmul.f32 %v658, %v809
      %v826 = vmul.f32 %v660, %v810
      %v827 = vmul.f32 %v662, %v811
      %v828 = vmul.f32 %v664, %v812
      %v829 = vmul.f32 %v666, %v813
      %v830 = vmul.f32 %v668, %v814
      %v831 = vmul.f32 %v670, %v815
      %v832 = vmul.f32 %v672, %v816
      %833 = vadd.xlane.f32.xlu0 %v770
      %v834 = vpop.xlane.xlu0 %833
      %835 = vadd.xlane.f32.xlu0 %v772
      %v836 = vpop.xlane.xlu0 %835
      %837 = vadd.xlane.f32.xlu0 %v774
      %v838 = vpop.xlane.xlu0 %837
      %839 = vadd.xlane.f32.xlu0 %v776
      %v840 = vpop.xlane.xlu0 %839
      %841 = vadd.xlane.f32.xlu0 %v778
      %v842 = vpop.xlane.xlu0 %841
      %843 = vadd.xlane.f32.xlu0 %v780
      %v844 = vpop.xlane.xlu0 %843
      %845 = vadd.xlane.f32.xlu0 %v782
      %v846 = vpop.xlane.xlu0 %845
      %847 = vadd.xlane.f32.xlu0 %v784
      %v848 = vpop.xlane.xlu0 %847
      %849 = vadd.xlane.f32.xlu0 %v786
      %v850 = vpop.xlane.xlu0 %849
      %851 = vadd.xlane.f32.xlu0 %v788
      %v852 = vpop.xlane.xlu0 %851
      %853 = vadd.xlane.f32.xlu0 %v790
      %v854 = vpop.xlane.xlu0 %853
      %855 = vadd.xlane.f32.xlu0 %v792
      %v856 = vpop.xlane.xlu0 %855
      %857 = vadd.xlane.f32.xlu0 %v794
      %v858 = vpop.xlane.xlu0 %857
      %859 = vadd.xlane.f32.xlu0 %v796
      %v860 = vpop.xlane.xlu0 %859
      %861 = vadd.xlane.f32.xlu0 %v798
      %v862 = vpop.xlane.xlu0 %861
      %863 = vadd.xlane.f32.xlu0 %v800
      %v864 = vpop.xlane.xlu0 %863
      %v865 = vadd.f32 %v817, %v834
      %v866 = vadd.f32 %v818, %v836
      %v867 = vadd.f32 %v819, %v838
      %v868 = vadd.f32 %v820, %v840
      %v869 = vadd.f32 %v821, %v842
      %v870 = vadd.f32 %v822, %v844
      %v871 = vadd.f32 %v823, %v846
      %v872 = vadd.f32 %v824, %v848
      %v873 = vadd.f32 %v825, %v850
      %v874 = vadd.f32 %v826, %v852
      %v875 = vadd.f32 %v827, %v854
      %v876 = vadd.f32 %v828, %v856
      %v877 = vadd.f32 %v829, %v858
      %v878 = vadd.f32 %v830, %v860
      %v879 = vadd.f32 %v831, %v862
      %v880 = vadd.f32 %v832, %v864
      %vm881 = vcmask 7168
      %882 = vst.msk [vmem:[#allocation4] sm:$0xff] %vm881, %v865
      %883 = vst.msk [vmem:[#allocation4 + $0x8] sm:$0xff] %vm881, %v866
      %884 = vst.msk [vmem:[#allocation4 + $0x10] sm:$0xff] %vm881, %v867
      %885 = vst.msk [vmem:[#allocation4 + $0x18] sm:$0xff] %vm881, %v868
      %886 = vst.msk [vmem:[#allocation4 + $0x20] sm:$0xff] %vm881, %v869
      %887 = vst.msk [vmem:[#allocation4 + $0x28] sm:$0xff] %vm881, %v870
      %888 = vst.msk [vmem:[#allocation4 + $0x30] sm:$0xff] %vm881, %v871
      %889 = vst.msk [vmem:[#allocation4 + $0x38] sm:$0xff] %vm881, %v872
      %890 = vst.msk [vmem:[#allocation4 + $0x40] sm:$0xff] %vm881, %v873
      %891 = vst.msk [vmem:[#allocation4 + $0x48] sm:$0xff] %vm881, %v874
      %892 = vst.msk [vmem:[#allocation4 + $0x50] sm:$0xff] %vm881, %v875
      %893 = vst.msk [vmem:[#allocation4 + $0x58] sm:$0xff] %vm881, %v876
      %894 = vst.msk [vmem:[#allocation4 + $0x60] sm:$0xff] %vm881, %v877
      %895 = vst.msk [vmem:[#allocation4 + $0x68] sm:$0xff] %vm881, %v878
      %896 = vst.msk [vmem:[#allocation4 + $0x70] sm:$0xff] %vm881, %v879
      %897 = vst.msk [vmem:[#allocation4 + $0x78] sm:$0xff] %vm881, %v880
      %898 = vst.msk [vmem:[#allocation3] sm:$0xff] %vm881, %v609
      %899 = vst.msk [vmem:[#allocation3 + $0x8] sm:$0xff] %vm881, %v610
      %900 = vst.msk [vmem:[#allocation3 + $0x10] sm:$0xff] %vm881, %v611
      %901 = vst.msk [vmem:[#allocation3 + $0x18] sm:$0xff] %vm881, %v612
      %902 = vst.msk [vmem:[#allocation3 + $0x20] sm:$0xff] %vm881, %v613
      %903 = vst.msk [vmem:[#allocation3 + $0x28] sm:$0xff] %vm881, %v614
      %904 = vst.msk [vmem:[#allocation3 + $0x30] sm:$0xff] %vm881, %v615
      %905 = vst.msk [vmem:[#allocation3 + $0x38] sm:$0xff] %vm881, %v616
      %906 = vst.msk [vmem:[#allocation3 + $0x40] sm:$0xff] %vm881, %v617
      %907 = vst.msk [vmem:[#allocation3 + $0x48] sm:$0xff] %vm881, %v618
      %908 = vst.msk [vmem:[#allocation3 + $0x50] sm:$0xff] %vm881, %v619
      %909 = vst.msk [vmem:[#allocation3 + $0x58] sm:$0xff] %vm881, %v620
      %910 = vst.msk [vmem:[#allocation3 + $0x60] sm:$0xff] %vm881, %v621
      %911 = vst.msk [vmem:[#allocation3 + $0x68] sm:$0xff] %vm881, %v622
      %912 = vst.msk [vmem:[#allocation3 + $0x70] sm:$0xff] %vm881, %v623
      %913 = vst.msk [vmem:[#allocation3 + $0x78] sm:$0xff] %vm881, %v624
      %v914 = vld [vmem:[#allocation5] sm:$0xff]
      %v915 = vld [vmem:[#allocation5 + $0x8] sm:$0xff]
      %v916 = vld [vmem:[#allocation5 + $0x10] sm:$0xff]
      %v917 = vld [vmem:[#allocation5 + $0x18] sm:$0xff]
      %v918 = vld [vmem:[#allocation5 + $0x20] sm:$0xff]
      %v919 = vld [vmem:[#allocation5 + $0x28] sm:$0xff]
      %v920 = vld [vmem:[#allocation5 + $0x30] sm:$0xff]
      %v921 = vld [vmem:[#allocation5 + $0x38] sm:$0xff]
      %v922 = vld [vmem:[#allocation5 + $0x40] sm:$0xff]
      %v923 = vld [vmem:[#allocation5 + $0x48] sm:$0xff]
      %v924 = vld [vmem:[#allocation5 + $0x50] sm:$0xff]
      %v925 = vld [vmem:[#allocation5 + $0x58] sm:$0xff]
      %v926 = vld [vmem:[#allocation5 + $0x60] sm:$0xff]
      %v927 = vld [vmem:[#allocation5 + $0x68] sm:$0xff]
      %v928 = vld [vmem:[#allocation5 + $0x70] sm:$0xff]
      %v929 = vld [vmem:[#allocation5 + $0x78] sm:$0xff]
      %v930 = vmul.f32 %v545, %v247
      %v931 = vmul.f32 %v546, %v252
      %v932 = vmul.f32 %v547, %v257
      %v933 = vmul.f32 %v548, %v262
      %v934 = vmul.f32 %v549, %v267
      %v935 = vmul.f32 %v550, %v272
      %v936 = vmul.f32 %v551, %v277
      %v937 = vmul.f32 %v552, %v282
      %v938 = vmul.f32 %v553, %v287
      %v939 = vmul.f32 %v554, %v292
      %v940 = vmul.f32 %v555, %v297
      %v941 = vmul.f32 %v556, %v302
      %v942 = vmul.f32 %v557, %v307
      %v943 = vmul.f32 %v558, %v312
      %v944 = vmul.f32 %v559, %v317
      %v945 = vmul.f32 %v560, %v322
      %946 = vadd.xlane.f32.xlu0 %v930
      %v947 = vpop.xlane.xlu0 %946
      %948 = vadd.xlane.f32.xlu0 %v931
      %v949 = vpop.xlane.xlu0 %948
      %950 = vadd.xlane.f32.xlu0 %v932
      %v951 = vpop.xlane.xlu0 %950
      %952 = vadd.xlane.f32.xlu0 %v933
      %v953 = vpop.xlane.xlu0 %952
      %954 = vadd.xlane.f32.xlu0 %v934
      %v955 = vpop.xlane.xlu0 %954
      %956 = vadd.xlane.f32.xlu0 %v935
      %v957 = vpop.xlane.xlu0 %956
      %958 = vadd.xlane.f32.xlu0 %v936
      %v959 = vpop.xlane.xlu0 %958
      %960 = vadd.xlane.f32.xlu0 %v937
      %v961 = vpop.xlane.xlu0 %960
      %962 = vadd.xlane.f32.xlu0 %v938
      %v963 = vpop.xlane.xlu0 %962
      %964 = vadd.xlane.f32.xlu0 %v939
      %v965 = vpop.xlane.xlu0 %964
      %966 = vadd.xlane.f32.xlu0 %v940
      %v967 = vpop.xlane.xlu0 %966
      %968 = vadd.xlane.f32.xlu0 %v941
      %v969 = vpop.xlane.xlu0 %968
      %970 = vadd.xlane.f32.xlu0 %v942
      %v971 = vpop.xlane.xlu0 %970
      %972 = vadd.xlane.f32.xlu0 %v943
      %v973 = vpop.xlane.xlu0 %972
      %974 = vadd.xlane.f32.xlu0 %v944
      %v975 = vpop.xlane.xlu0 %974
      %976 = vadd.xlane.f32.xlu0 %v945
      %v977 = vpop.xlane.xlu0 %976
      %v978 = vadd.f32 %v914, %v947
      %v979 = vadd.f32 %v915, %v949
      %v980 = vadd.f32 %v916, %v951
      %v981 = vadd.f32 %v917, %v953
      %v982 = vadd.f32 %v918, %v955
      %v983 = vadd.f32 %v919, %v957
      %v984 = vadd.f32 %v920, %v959
      %v985 = vadd.f32 %v921, %v961
      %v986 = vadd.f32 %v922, %v963
      %v987 = vadd.f32 %v923, %v965
      %v988 = vadd.f32 %v924, %v967
      %v989 = vadd.f32 %v925, %v969
      %v990 = vadd.f32 %v926, %v971
      %v991 = vadd.f32 %v927, %v973
      %v992 = vadd.f32 %v928, %v975
      %v993 = vadd.f32 %v929, %v977
      %994 = vst.msk [vmem:[#allocation5] sm:$0xff] %vm881, %v978
      %995 = vst.msk [vmem:[#allocation5 + $0x8] sm:$0xff] %vm881, %v979
      %996 = vst.msk [vmem:[#allocation5 + $0x10] sm:$0xff] %vm881, %v980
      %997 = vst.msk [vmem:[#allocation5 + $0x18] sm:$0xff] %vm881, %v981
      %998 = vst.msk [vmem:[#allocation5 + $0x20] sm:$0xff] %vm881, %v982
      %999 = vst.msk [vmem:[#allocation5 + $0x28] sm:$0xff] %vm881, %v983
      %1000 = vst.msk [vmem:[#allocation5 + $0x30] sm:$0xff] %vm881, %v984
      %1001 = vst.msk [vmem:[#allocation5 + $0x38] sm:$0xff] %vm881, %v985
      %1002 = vst.msk [vmem:[#allocation5 + $0x40] sm:$0xff] %vm881, %v986
      %1003 = vst.msk [vmem:[#allocation5 + $0x48] sm:$0xff] %vm881, %v987
      %1004 = vst.msk [vmem:[#allocation5 + $0x50] sm:$0xff] %vm881, %v988
      %1005 = vst.msk [vmem:[#allocation5 + $0x58] sm:$0xff] %vm881, %v989
      %1006 = vst.msk [vmem:[#allocation5 + $0x60] sm:$0xff] %vm881, %v990
      %1007 = vst.msk [vmem:[#allocation5 + $0x68] sm:$0xff] %vm881, %v991
      %1008 = vst.msk [vmem:[#allocation5 + $0x70] sm:$0xff] %vm881, %v992
      %1009 = vst.msk [vmem:[#allocation5 + $0x78] sm:$0xff] %vm881, %v993
      %v1010 = vld [vmem:[#allocation6] sm:$0xff]
      %v1011 = vld [vmem:[#allocation6 + $0x8] sm:$0xff]
      %v1012 = vld [vmem:[#allocation6 + $0x10] sm:$0xff]
      %v1013 = vld [vmem:[#allocation6 + $0x18] sm:$0xff]
      %v1014 = vld [vmem:[#allocation6 + $0x20] sm:$0xff]
      %v1015 = vld [vmem:[#allocation6 + $0x28] sm:$0xff]
      %v1016 = vld [vmem:[#allocation6 + $0x30] sm:$0xff]
      %v1017 = vld [vmem:[#allocation6 + $0x38] sm:$0xff]
      %v1018 = vld [vmem:[#allocation6 + $0x40] sm:$0xff]
      %v1019 = vld [vmem:[#allocation6 + $0x48] sm:$0xff]
      %v1020 = vld [vmem:[#allocation6 + $0x50] sm:$0xff]
      %v1021 = vld [vmem:[#allocation6 + $0x58] sm:$0xff]
      %v1022 = vld [vmem:[#allocation6 + $0x60] sm:$0xff]
      %v1023 = vld [vmem:[#allocation6 + $0x68] sm:$0xff]
      %v1024 = vld [vmem:[#allocation6 + $0x70] sm:$0xff]
      %v1025 = vld [vmem:[#allocation6 + $0x78] sm:$0xff]
      %1026 = vadd.xlane.f32.xlu0 %v545
      %v1027 = vpop.xlane.xlu0 %1026
      %1028 = vadd.xlane.f32.xlu0 %v546
      %v1029 = vpop.xlane.xlu0 %1028
      %1030 = vadd.xlane.f32.xlu0 %v547
      %v1031 = vpop.xlane.xlu0 %1030
      %1032 = vadd.xlane.f32.xlu0 %v548
      %v1033 = vpop.xlane.xlu0 %1032
      %1034 = vadd.xlane.f32.xlu0 %v549
      %v1035 = vpop.xlane.xlu0 %1034
      %1036 = vadd.xlane.f32.xlu0 %v550
      %v1037 = vpop.xlane.xlu0 %1036
      %1038 = vadd.xlane.f32.xlu0 %v551
      %v1039 = vpop.xlane.xlu0 %1038
      %1040 = vadd.xlane.f32.xlu0 %v552
      %v1041 = vpop.xlane.xlu0 %1040
      %1042 = vadd.xlane.f32.xlu0 %v553
      %v1043 = vpop.xlane.xlu0 %1042
      %1044 = vadd.xlane.f32.xlu0 %v554
      %v1045 = vpop.xlane.xlu0 %1044
      %1046 = vadd.xlane.f32.xlu0 %v555
      %v1047 = vpop.xlane.xlu0 %1046
      %1048 = vadd.xlane.f32.xlu0 %v556
      %v1049 = vpop.xlane.xlu0 %1048
      %1050 = vadd.xlane.f32.xlu0 %v557
      %v1051 = vpop.xlane.xlu0 %1050
      %1052 = vadd.xlane.f32.xlu0 %v558
      %v1053 = vpop.xlane.xlu0 %1052
      %1054 = vadd.xlane.f32.xlu0 %v559
      %v1055 = vpop.xlane.xlu0 %1054
      %1056 = vadd.xlane.f32.xlu0 %v560
      %v1057 = vpop.xlane.xlu0 %1056
      %v1058 = vadd.f32 %v1010, %v1027
      %v1059 = vadd.f32 %v1011, %v1029
      %v1060 = vadd.f32 %v1012, %v1031
      %v1061 = vadd.f32 %v1013, %v1033
      %v1062 = vadd.f32 %v1014, %v1035
      %v1063 = vadd.f32 %v1015, %v1037
      %v1064 = vadd.f32 %v1016, %v1039
      %v1065 = vadd.f32 %v1017, %v1041
      %v1066 = vadd.f32 %v1018, %v1043
      %v1067 = vadd.f32 %v1019, %v1045
      %v1068 = vadd.f32 %v1020, %v1047
      %v1069 = vadd.f32 %v1021, %v1049
      %v1070 = vadd.f32 %v1022, %v1051
      %v1071 = vadd.f32 %v1023, %v1053
      %v1072 = vadd.f32 %v1024, %v1055
      %v1073 = vadd.f32 %v1025, %v1057
      %1074 = vst.msk [vmem:[#allocation6] sm:$0xff] %vm881, %v1058
      %1075 = vst.msk [vmem:[#allocation6 + $0x8] sm:$0xff] %vm881, %v1059
      %1076 = vst.msk [vmem:[#allocation6 + $0x10] sm:$0xff] %vm881, %v1060
      %1077 = vst.msk [vmem:[#allocation6 + $0x18] sm:$0xff] %vm881, %v1061
      %1078 = vst.msk [vmem:[#allocation6 + $0x20] sm:$0xff] %vm881, %v1062
      %1079 = vst.msk [vmem:[#allocation6 + $0x28] sm:$0xff] %vm881, %v1063
      %1080 = vst.msk [vmem:[#allocation6 + $0x30] sm:$0xff] %vm881, %v1064
      %1081 = vst.msk [vmem:[#allocation6 + $0x38] sm:$0xff] %vm881, %v1065
      %1082 = vst.msk [vmem:[#allocation6 + $0x40] sm:$0xff] %vm881, %v1066
      %1083 = vst.msk [vmem:[#allocation6 + $0x48] sm:$0xff] %vm881, %v1067
      %1084 = vst.msk [vmem:[#allocation6 + $0x50] sm:$0xff] %vm881, %v1068
      %1085 = vst.msk [vmem:[#allocation6 + $0x58] sm:$0xff] %vm881, %v1069
      %1086 = vst.msk [vmem:[#allocation6 + $0x60] sm:$0xff] %vm881, %v1070
      %1087 = vst.msk [vmem:[#allocation6 + $0x68] sm:$0xff] %vm881, %v1071
      %1088 = vst.msk [vmem:[#allocation6 + $0x70] sm:$0xff] %vm881, %v1072
      %1089 = vst.msk [vmem:[#allocation6 + $0x78] sm:$0xff] %vm881, %v1073
    $region29: #{tpu_custom_call.1} parent=1 // pred_fallthru
      _
    %p1090 = pneg %p420
    // Predicated region
    $region30: #{tpu_custom_call.1} parent=1 // pred_check
      _
    $region31: #{tpu_custom_call.1} parent=1 // pred_check_branch
      %1092 = sbr.rel (%p420) target = $region33
    $region32: #{tpu_custom_call.1} parent=1 // pred_region
      %v1093 = vsel %vm394, 1, 0
      %v1094 = vsel %vm395, 1, 0
      %v1095 = vsel %vm396, 1, 0
      %v1096 = vsel %vm397, 1, 0
      %v1097 = vsel %vm398, 1, 0
      %v1098 = vsel %vm399, 1, 0
      %v1099 = vsel %vm400, 1, 0
      %v1100 = vsel %vm401, 1, 0
      %v1101 = vsel %vm402, 1, 0
      %v1102 = vsel %vm403, 1, 0
      %v1103 = vsel %vm404, 1, 0
      %v1104 = vsel %vm405, 1, 0
      %v1105 = vsel %vm406, 1, 0
      %v1106 = vsel %vm407, 1, 0
      %v1107 = vsel %vm408, 1, 0
      %v1108 = vsel %vm409, 1, 0
      %v1109 = vcvt.s32.f32 %v1093
      %v1110 = vcvt.s32.f32 %v1094
      %v1111 = vcvt.s32.f32 %v1095
      %v1112 = vcvt.s32.f32 %v1096
      %v1113 = vcvt.s32.f32 %v1097
      %v1114 = vcvt.s32.f32 %v1098
      %v1115 = vcvt.s32.f32 %v1099
      %v1116 = vcvt.s32.f32 %v1100
      %v1117 = vcvt.s32.f32 %v1101
      %v1118 = vcvt.s32.f32 %v1102
      %v1119 = vcvt.s32.f32 %v1103
      %v1120 = vcvt.s32.f32 %v1104
      %v1121 = vcvt.s32.f32 %v1105
      %v1122 = vcvt.s32.f32 %v1106
      %v1123 = vcvt.s32.f32 %v1107
      %v1124 = vcvt.s32.f32 %v1108
      %v1125 = vld [vmem:[#allocation3] sm:$0xff]
      %v1126 = vld [vmem:[#allocation3 + $0x8] sm:$0xff]
      %v1127 = vld [vmem:[#allocation3 + $0x10] sm:$0xff]
      %v1128 = vld [vmem:[#allocation3 + $0x18] sm:$0xff]
      %v1129 = vld [vmem:[#allocation3 + $0x20] sm:$0xff]
      %v1130 = vld [vmem:[#allocation3 + $0x28] sm:$0xff]
      %v1131 = vld [vmem:[#allocation3 + $0x30] sm:$0xff]
      %v1132 = vld [vmem:[#allocation3 + $0x38] sm:$0xff]
      %v1133 = vld [vmem:[#allocation3 + $0x40] sm:$0xff]
      %v1134 = vld [vmem:[#allocation3 + $0x48] sm:$0xff]
      %v1135 = vld [vmem:[#allocation3 + $0x50] sm:$0xff]
      %v1136 = vld [vmem:[#allocation3 + $0x58] sm:$0xff]
      %v1137 = vld [vmem:[#allocation3 + $0x60] sm:$0xff]
      %v1138 = vld [vmem:[#allocation3 + $0x68] sm:$0xff]
      %v1139 = vld [vmem:[#allocation3 + $0x70] sm:$0xff]
      %v1140 = vld [vmem:[#allocation3 + $0x78] sm:$0xff]
      %1141 = vmax.xlane.f32.xlu0 %v247
      %v1142 = vpop.xlane.xlu0 %1141
      %1143 = vmax.xlane.f32.xlu0 %v252
      %v1144 = vpop.xlane.xlu0 %1143
      %1145 = vmax.xlane.f32.xlu0 %v257
      %v1146 = vpop.xlane.xlu0 %1145
      %1147 = vmax.xlane.f32.xlu0 %v262
      %v1148 = vpop.xlane.xlu0 %1147
      %1149 = vmax.xlane.f32.xlu0 %v267
      %v1150 = vpop.xlane.xlu0 %1149
      %1151 = vmax.xlane.f32.xlu0 %v272
      %v1152 = vpop.xlane.xlu0 %1151
      %1153 = vmax.xlane.f32.xlu0 %v277
      %v1154 = vpop.xlane.xlu0 %1153
      %1155 = vmax.xlane.f32.xlu0 %v282
      %v1156 = vpop.xlane.xlu0 %1155
      %1157 = vmax.xlane.f32.xlu0 %v287
      %v1158 = vpop.xlane.xlu0 %1157
      %1159 = vmax.xlane.f32.xlu0 %v292
      %v1160 = vpop.xlane.xlu0 %1159
      %1161 = vmax.xlane.f32.xlu0 %v297
      %v1162 = vpop.xlane.xlu0 %1161
      %1163 = vmax.xlane.f32.xlu0 %v302
      %v1164 = vpop.xlane.xlu0 %1163
      %1165 = vmax.xlane.f32.xlu0 %v307
      %v1166 = vpop.xlane.xlu0 %1165
      %1167 = vmax.xlane.f32.xlu0 %v312
      %v1168 = vpop.xlane.xlu0 %1167
      %1169 = vmax.xlane.f32.xlu0 %v317
      %v1170 = vpop.xlane.xlu0 %1169
      %1171 = vmax.xlane.f32.xlu0 %v322
      %v1172 = vpop.xlane.xlu0 %1171
      %v1173 = vmax.f32 %v1125, %v1142
      %v1174 = vmax.f32 %v1126, %v1144
      %v1175 = vmax.f32 %v1127, %v1146
      %v1176 = vmax.f32 %v1128, %v1148
      %v1177 = vmax.f32 %v1129, %v1150
      %v1178 = vmax.f32 %v1130, %v1152
      %v1179 = vmax.f32 %v1131, %v1154
      %v1180 = vmax.f32 %v1132, %v1156
      %v1181 = vmax.f32 %v1133, %v1158
      %v1182 = vmax.f32 %v1134, %v1160
      %v1183 = vmax.f32 %v1135, %v1162
      %v1184 = vmax.f32 %v1136, %v1164
      %v1185 = vmax.f32 %v1137, %v1166
      %v1186 = vmax.f32 %v1138, %v1168
      %v1187 = vmax.f32 %v1139, %v1170
      %v1188 = vmax.f32 %v1140, %v1172
      %v1189 = vsub.f32 %v1125, %v1173
      %v1190 = vsub.f32 %v1126, %v1174
      %v1191 = vsub.f32 %v1127, %v1175
      %v1192 = vsub.f32 %v1128, %v1176
      %v1193 = vsub.f32 %v1129, %v1177
      %v1194 = vsub.f32 %v1130, %v1178
      %v1195 = vsub.f32 %v1131, %v1179
      %v1196 = vsub.f32 %v1132, %v1180
      %v1197 = vsub.f32 %v1133, %v1181
      %v1198 = vsub.f32 %v1134, %v1182
      %v1199 = vsub.f32 %v1135, %v1183
      %v1200 = vsub.f32 %v1136, %v1184
      %v1201 = vsub.f32 %v1137, %v1185
      %v1202 = vsub.f32 %v1138, %v1186
      %v1203 = vsub.f32 %v1139, %v1187
      %v1204 = vsub.f32 %v1140, %v1188
      %v1205 = vmul.f32 %v1189, 1.442695
      %v1206 = vpow.pop %v1205
      %v1207 = vmul.f32 %v1190, 1.442695
      %v1208 = vpow.pop %v1207
      %v1209 = vmul.f32 %v1191, 1.442695
      %v1210 = vpow.pop %v1209
      %v1211 = vmul.f32 %v1192, 1.442695
      %v1212 = vpow.pop %v1211
      %v1213 = vmul.f32 %v1193, 1.442695
      %v1214 = vpow.pop %v1213
      %v1215 = vmul.f32 %v1194, 1.442695
      %v1216 = vpow.pop %v1215
      %v1217 = vmul.f32 %v1195, 1.442695
      %v1218 = vpow.pop %v1217
      %v1219 = vmul.f32 %v1196, 1.442695
      %v1220 = vpow.pop %v1219
      %v1221 = vmul.f32 %v1197, 1.442695
      %v1222 = vpow.pop %v1221
      %v1223 = vmul.f32 %v1198, 1.442695
      %v1224 = vpow.pop %v1223
      %v1225 = vmul.f32 %v1199, 1.442695
      %v1226 = vpow.pop %v1225
      %v1227 = vmul.f32 %v1200, 1.442695
      %v1228 = vpow.pop %v1227
      %v1229 = vmul.f32 %v1201, 1.442695
      %v1230 = vpow.pop %v1229
      %v1231 = vmul.f32 %v1202, 1.442695
      %v1232 = vpow.pop %v1231
      %v1233 = vmul.f32 %v1203, 1.442695
      %v1234 = vpow.pop %v1233
      %v1235 = vmul.f32 %v1204, 1.442695
      %v1236 = vpow.pop %v1235
      %1238 = vset.pattern.permute.xlu0 0
      %1239 = vperm.xlu0 %1238, %v1173
      %v1240 = vpop.permute.xlu0 %1239
      %1243 = vset.pattern.permute.xlu0 0
      %1244 = vperm.xlu0 %1243, %v1174
      %v1245 = vpop.permute.xlu0 %1244
      %1248 = vset.pattern.permute.xlu0 0
      %1249 = vperm.xlu0 %1248, %v1175
      %v1250 = vpop.permute.xlu0 %1249
      %1253 = vset.pattern.permute.xlu0 0
      %1254 = vperm.xlu0 %1253, %v1176
      %v1255 = vpop.permute.xlu0 %1254
      %1258 = vset.pattern.permute.xlu0 0
      %1259 = vperm.xlu0 %1258, %v1177
      %v1260 = vpop.permute.xlu0 %1259
      %1263 = vset.pattern.permute.xlu0 0
      %1264 = vperm.xlu0 %1263, %v1178
      %v1265 = vpop.permute.xlu0 %1264
      %1268 = vset.pattern.permute.xlu0 0
      %1269 = vperm.xlu0 %1268, %v1179
      %v1270 = vpop.permute.xlu0 %1269
      %1273 = vset.pattern.permute.xlu0 0
      %1274 = vperm.xlu0 %1273, %v1180
      %v1275 = vpop.permute.xlu0 %1274
      %1278 = vset.pattern.permute.xlu0 0
      %1279 = vperm.xlu0 %1278, %v1181
      %v1280 = vpop.permute.xlu0 %1279
      %1283 = vset.pattern.permute.xlu0 0
      %1284 = vperm.xlu0 %1283, %v1182
      %v1285 = vpop.permute.xlu0 %1284
      %1288 = vset.pattern.permute.xlu0 0
      %1289 = vperm.xlu0 %1288, %v1183
      %v1290 = vpop.permute.xlu0 %1289
      %1293 = vset.pattern.permute.xlu0 0
      %1294 = vperm.xlu0 %1293, %v1184
      %v1295 = vpop.permute.xlu0 %1294
      %1298 = vset.pattern.permute.xlu0 0
      %1299 = vperm.xlu0 %1298, %v1185
      %v1300 = vpop.permute.xlu0 %1299
      %1303 = vset.pattern.permute.xlu0 0
      %1304 = vperm.xlu0 %1303, %v1186
      %v1305 = vpop.permute.xlu0 %1304
      %1308 = vset.pattern.permute.xlu0 0
      %1309 = vperm.xlu0 %1308, %v1187
      %v1310 = vpop.permute.xlu0 %1309
      %1313 = vset.pattern.permute.xlu0 0
      %1314 = vperm.xlu0 %1313, %v1188
      %v1315 = vpop.permute.xlu0 %1314
      %v1317 = vsub.f32 %v247, %v1240
      %v1318 = vsub.f32 %v252, %v1245
      %v1319 = vsub.f32 %v257, %v1250
      %v1320 = vsub.f32 %v262, %v1255
      %v1321 = vsub.f32 %v267, %v1260
      %v1322 = vsub.f32 %v272, %v1265
      %v1323 = vsub.f32 %v277, %v1270
      %v1324 = vsub.f32 %v282, %v1275
      %v1325 = vsub.f32 %v287, %v1280
      %v1326 = vsub.f32 %v292, %v1285
      %v1327 = vsub.f32 %v297, %v1290
      %v1328 = vsub.f32 %v302, %v1295
      %v1329 = vsub.f32 %v307, %v1300
      %v1330 = vsub.f32 %v312, %v1305
      %v1331 = vsub.f32 %v317, %v1310
      %v1332 = vsub.f32 %v322, %v1315
      %v1333 = vmul.f32 %v1317, 1.442695
      %v1334 = vpow.pop %v1333
      %v1335 = vmul.f32 %v1318, 1.442695
      %v1336 = vpow.pop %v1335
      %v1337 = vmul.f32 %v1319, 1.442695
      %v1338 = vpow.pop %v1337
      %v1339 = vmul.f32 %v1320, 1.442695
      %v1340 = vpow.pop %v1339
      %v1341 = vmul.f32 %v1321, 1.442695
      %v1342 = vpow.pop %v1341
      %v1343 = vmul.f32 %v1322, 1.442695
      %v1344 = vpow.pop %v1343
      %v1345 = vmul.f32 %v1323, 1.442695
      %v1346 = vpow.pop %v1345
      %v1347 = vmul.f32 %v1324, 1.442695
      %v1348 = vpow.pop %v1347
      %v1349 = vmul.f32 %v1325, 1.442695
      %v1350 = vpow.pop %v1349
      %v1351 = vmul.f32 %v1326, 1.442695
      %v1352 = vpow.pop %v1351
      %v1353 = vmul.f32 %v1327, 1.442695
      %v1354 = vpow.pop %v1353
      %v1355 = vmul.f32 %v1328, 1.442695
      %v1356 = vpow.pop %v1355
      %v1357 = vmul.f32 %v1329, 1.442695
      %v1358 = vpow.pop %v1357
      %v1359 = vmul.f32 %v1330, 1.442695
      %v1360 = vpow.pop %v1359
      %v1361 = vmul.f32 %v1331, 1.442695
      %v1362 = vpow.pop %v1361
      %v1363 = vmul.f32 %v1332, 1.442695
      %v1364 = vpow.pop %v1363
      %v1365 = vld [vmem:[#allocation4] sm:$0xff]
      %v1366 = vld [vmem:[#allocation4 + $0x8] sm:$0xff]
      %v1367 = vld [vmem:[#allocation4 + $0x10] sm:$0xff]
      %v1368 = vld [vmem:[#allocation4 + $0x18] sm:$0xff]
      %v1369 = vld [vmem:[#allocation4 + $0x20] sm:$0xff]
      %v1370 = vld [vmem:[#allocation4 + $0x28] sm:$0xff]
      %v1371 = vld [vmem:[#allocation4 + $0x30] sm:$0xff]
      %v1372 = vld [vmem:[#allocation4 + $0x38] sm:$0xff]
      %v1373 = vld [vmem:[#allocation4 + $0x40] sm:$0xff]
      %v1374 = vld [vmem:[#allocation4 + $0x48] sm:$0xff]
      %v1375 = vld [vmem:[#allocation4 + $0x50] sm:$0xff]
      %v1376 = vld [vmem:[#allocation4 + $0x58] sm:$0xff]
      %v1377 = vld [vmem:[#allocation4 + $0x60] sm:$0xff]
      %v1378 = vld [vmem:[#allocation4 + $0x68] sm:$0xff]
      %v1379 = vld [vmem:[#allocation4 + $0x70] sm:$0xff]
      %v1380 = vld [vmem:[#allocation4 + $0x78] sm:$0xff]
      %v1381 = vmul.f32 %v1206, %v1365
      %v1382 = vmul.f32 %v1208, %v1366
      %v1383 = vmul.f32 %v1210, %v1367
      %v1384 = vmul.f32 %v1212, %v1368
      %v1385 = vmul.f32 %v1214, %v1369
      %v1386 = vmul.f32 %v1216, %v1370
      %v1387 = vmul.f32 %v1218, %v1371
      %v1388 = vmul.f32 %v1220, %v1372
      %v1389 = vmul.f32 %v1222, %v1373
      %v1390 = vmul.f32 %v1224, %v1374
      %v1391 = vmul.f32 %v1226, %v1375
      %v1392 = vmul.f32 %v1228, %v1376
      %v1393 = vmul.f32 %v1230, %v1377
      %v1394 = vmul.f32 %v1232, %v1378
      %v1395 = vmul.f32 %v1234, %v1379
      %v1396 = vmul.f32 %v1236, %v1380
      %1397 = vadd.xlane.f32.xlu0 %v1334
      %v1398 = vpop.xlane.xlu0 %1397
      %1399 = vadd.xlane.f32.xlu0 %v1336
      %v1400 = vpop.xlane.xlu0 %1399
      %1401 = vadd.xlane.f32.xlu0 %v1338
      %v1402 = vpop.xlane.xlu0 %1401
      %1403 = vadd.xlane.f32.xlu0 %v1340
      %v1404 = vpop.xlane.xlu0 %1403
      %1405 = vadd.xlane.f32.xlu0 %v1342
      %v1406 = vpop.xlane.xlu0 %1405
      %1407 = vadd.xlane.f32.xlu0 %v1344
      %v1408 = vpop.xlane.xlu0 %1407
      %1409 = vadd.xlane.f32.xlu0 %v1346
      %v1410 = vpop.xlane.xlu0 %1409
      %1411 = vadd.xlane.f32.xlu0 %v1348
      %v1412 = vpop.xlane.xlu0 %1411
      %1413 = vadd.xlane.f32.xlu0 %v1350
      %v1414 = vpop.xlane.xlu0 %1413
      %1415 = vadd.xlane.f32.xlu0 %v1352
      %v1416 = vpop.xlane.xlu0 %1415
      %1417 = vadd.xlane.f32.xlu0 %v1354
      %v1418 = vpop.xlane.xlu0 %1417
      %1419 = vadd.xlane.f32.xlu0 %v1356
      %v1420 = vpop.xlane.xlu0 %1419
      %1421 = vadd.xlane.f32.xlu0 %v1358
      %v1422 = vpop.xlane.xlu0 %1421
      %1423 = vadd.xlane.f32.xlu0 %v1360
      %v1424 = vpop.xlane.xlu0 %1423
      %1425 = vadd.xlane.f32.xlu0 %v1362
      %v1426 = vpop.xlane.xlu0 %1425
      %1427 = vadd.xlane.f32.xlu0 %v1364
      %v1428 = vpop.xlane.xlu0 %1427
      %v1429 = vadd.f32 %v1381, %v1398
      %v1430 = vadd.f32 %v1382, %v1400
      %v1431 = vadd.f32 %v1383, %v1402
      %v1432 = vadd.f32 %v1384, %v1404
      %v1433 = vadd.f32 %v1385, %v1406
      %v1434 = vadd.f32 %v1386, %v1408
      %v1435 = vadd.f32 %v1387, %v1410
      %v1436 = vadd.f32 %v1388, %v1412
      %v1437 = vadd.f32 %v1389, %v1414
      %v1438 = vadd.f32 %v1390, %v1416
      %v1439 = vadd.f32 %v1391, %v1418
      %v1440 = vadd.f32 %v1392, %v1420
      %v1441 = vadd.f32 %v1393, %v1422
      %v1442 = vadd.f32 %v1394, %v1424
      %v1443 = vadd.f32 %v1395, %v1426
      %v1444 = vadd.f32 %v1396, %v1428
      %vm1445 = vcmask 7168
      %1446 = vst.msk [vmem:[#allocation4] sm:$0xff] %vm1445, %v1429
      %1447 = vst.msk [vmem:[#allocation4 + $0x8] sm:$0xff] %vm1445, %v1430
      %1448 = vst.msk [vmem:[#allocation4 + $0x10] sm:$0xff] %vm1445, %v1431
      %1449 = vst.msk [vmem:[#allocation4 + $0x18] sm:$0xff] %vm1445, %v1432
      %1450 = vst.msk [vmem:[#allocation4 + $0x20] sm:$0xff] %vm1445, %v1433
      %1451 = vst.msk [vmem:[#allocation4 + $0x28] sm:$0xff] %vm1445, %v1434
      %1452 = vst.msk [vmem:[#allocation4 + $0x30] sm:$0xff] %vm1445, %v1435
      %1453 = vst.msk [vmem:[#allocation4 + $0x38] sm:$0xff] %vm1445, %v1436
      %1454 = vst.msk [vmem:[#allocation4 + $0x40] sm:$0xff] %vm1445, %v1437
      %1455 = vst.msk [vmem:[#allocation4 + $0x48] sm:$0xff] %vm1445, %v1438
      %1456 = vst.msk [vmem:[#allocation4 + $0x50] sm:$0xff] %vm1445, %v1439
      %1457 = vst.msk [vmem:[#allocation4 + $0x58] sm:$0xff] %vm1445, %v1440
      %1458 = vst.msk [vmem:[#allocation4 + $0x60] sm:$0xff] %vm1445, %v1441
      %1459 = vst.msk [vmem:[#allocation4 + $0x68] sm:$0xff] %vm1445, %v1442
      %1460 = vst.msk [vmem:[#allocation4 + $0x70] sm:$0xff] %vm1445, %v1443
      %1461 = vst.msk [vmem:[#allocation4 + $0x78] sm:$0xff] %vm1445, %v1444
      %1462 = vst.msk [vmem:[#allocation3] sm:$0xff] %vm1445, %v1173
      %1463 = vst.msk [vmem:[#allocation3 + $0x8] sm:$0xff] %vm1445, %v1174
      %1464 = vst.msk [vmem:[#allocation3 + $0x10] sm:$0xff] %vm1445, %v1175
      %1465 = vst.msk [vmem:[#allocation3 + $0x18] sm:$0xff] %vm1445, %v1176
      %1466 = vst.msk [vmem:[#allocation3 + $0x20] sm:$0xff] %vm1445, %v1177
      %1467 = vst.msk [vmem:[#allocation3 + $0x28] sm:$0xff] %vm1445, %v1178
      %1468 = vst.msk [vmem:[#allocation3 + $0x30] sm:$0xff] %vm1445, %v1179
      %1469 = vst.msk [vmem:[#allocation3 + $0x38] sm:$0xff] %vm1445, %v1180
      %1470 = vst.msk [vmem:[#allocation3 + $0x40] sm:$0xff] %vm1445, %v1181
      %1471 = vst.msk [vmem:[#allocation3 + $0x48] sm:$0xff] %vm1445, %v1182
      %1472 = vst.msk [vmem:[#allocation3 + $0x50] sm:$0xff] %vm1445, %v1183
      %1473 = vst.msk [vmem:[#allocation3 + $0x58] sm:$0xff] %vm1445, %v1184
      %1474 = vst.msk [vmem:[#allocation3 + $0x60] sm:$0xff] %vm1445, %v1185
      %1475 = vst.msk [vmem:[#allocation3 + $0x68] sm:$0xff] %vm1445, %v1186
      %1476 = vst.msk [vmem:[#allocation3 + $0x70] sm:$0xff] %vm1445, %v1187
      %1477 = vst.msk [vmem:[#allocation3 + $0x78] sm:$0xff] %vm1445, %v1188
      %v1478 = vld [vmem:[#allocation5] sm:$0xff]
      %v1479 = vld [vmem:[#allocation5 + $0x8] sm:$0xff]
      %v1480 = vld [vmem:[#allocation5 + $0x10] sm:$0xff]
      %v1481 = vld [vmem:[#allocation5 + $0x18] sm:$0xff]
      %v1482 = vld [vmem:[#allocation5 + $0x20] sm:$0xff]
      %v1483 = vld [vmem:[#allocation5 + $0x28] sm:$0xff]
      %v1484 = vld [vmem:[#allocation5 + $0x30] sm:$0xff]
      %v1485 = vld [vmem:[#allocation5 + $0x38] sm:$0xff]
      %v1486 = vld [vmem:[#allocation5 + $0x40] sm:$0xff]
      %v1487 = vld [vmem:[#allocation5 + $0x48] sm:$0xff]
      %v1488 = vld [vmem:[#allocation5 + $0x50] sm:$0xff]
      %v1489 = vld [vmem:[#allocation5 + $0x58] sm:$0xff]
      %v1490 = vld [vmem:[#allocation5 + $0x60] sm:$0xff]
      %v1491 = vld [vmem:[#allocation5 + $0x68] sm:$0xff]
      %v1492 = vld [vmem:[#allocation5 + $0x70] sm:$0xff]
      %v1493 = vld [vmem:[#allocation5 + $0x78] sm:$0xff]
      %v1494 = vmul.f32 %v1109, %v247
      %v1495 = vmul.f32 %v1110, %v252
      %v1496 = vmul.f32 %v1111, %v257
      %v1497 = vmul.f32 %v1112, %v262
      %v1498 = vmul.f32 %v1113, %v267
      %v1499 = vmul.f32 %v1114, %v272
      %v1500 = vmul.f32 %v1115, %v277
      %v1501 = vmul.f32 %v1116, %v282
      %v1502 = vmul.f32 %v1117, %v287
      %v1503 = vmul.f32 %v1118, %v292
      %v1504 = vmul.f32 %v1119, %v297
      %v1505 = vmul.f32 %v1120, %v302
      %v1506 = vmul.f32 %v1121, %v307
      %v1507 = vmul.f32 %v1122, %v312
      %v1508 = vmul.f32 %v1123, %v317
      %v1509 = vmul.f32 %v1124, %v322
      %1510 = vadd.xlane.f32.xlu0 %v1494
      %v1511 = vpop.xlane.xlu0 %1510
      %1512 = vadd.xlane.f32.xlu0 %v1495
      %v1513 = vpop.xlane.xlu0 %1512
      %1514 = vadd.xlane.f32.xlu0 %v1496
      %v1515 = vpop.xlane.xlu0 %1514
      %1516 = vadd.xlane.f32.xlu0 %v1497
      %v1517 = vpop.xlane.xlu0 %1516
      %1518 = vadd.xlane.f32.xlu0 %v1498
      %v1519 = vpop.xlane.xlu0 %1518
      %1520 = vadd.xlane.f32.xlu0 %v1499
      %v1521 = vpop.xlane.xlu0 %1520
      %1522 = vadd.xlane.f32.xlu0 %v1500
      %v1523 = vpop.xlane.xlu0 %1522
      %1524 = vadd.xlane.f32.xlu0 %v1501
      %v1525 = vpop.xlane.xlu0 %1524
      %1526 = vadd.xlane.f32.xlu0 %v1502
      %v1527 = vpop.xlane.xlu0 %1526
      %1528 = vadd.xlane.f32.xlu0 %v1503
      %v1529 = vpop.xlane.xlu0 %1528
      %1530 = vadd.xlane.f32.xlu0 %v1504
      %v1531 = vpop.xlane.xlu0 %1530
      %1532 = vadd.xlane.f32.xlu0 %v1505
      %v1533 = vpop.xlane.xlu0 %1532
      %1534 = vadd.xlane.f32.xlu0 %v1506
      %v1535 = vpop.xlane.xlu0 %1534
      %1536 = vadd.xlane.f32.xlu0 %v1507
      %v1537 = vpop.xlane.xlu0 %1536
      %1538 = vadd.xlane.f32.xlu0 %v1508
      %v1539 = vpop.xlane.xlu0 %1538
      %1540 = vadd.xlane.f32.xlu0 %v1509
      %v1541 = vpop.xlane.xlu0 %1540
      %v1542 = vadd.f32 %v1478, %v1511
      %v1543 = vadd.f32 %v1479, %v1513
      %v1544 = vadd.f32 %v1480, %v1515
      %v1545 = vadd.f32 %v1481, %v1517
      %v1546 = vadd.f32 %v1482, %v1519
      %v1547 = vadd.f32 %v1483, %v1521
      %v1548 = vadd.f32 %v1484, %v1523
      %v1549 = vadd.f32 %v1485, %v1525
      %v1550 = vadd.f32 %v1486, %v1527
      %v1551 = vadd.f32 %v1487, %v1529
      %v1552 = vadd.f32 %v1488, %v1531
      %v1553 = vadd.f32 %v1489, %v1533
      %v1554 = vadd.f32 %v1490, %v1535
      %v1555 = vadd.f32 %v1491, %v1537
      %v1556 = vadd.f32 %v1492, %v1539
      %v1557 = vadd.f32 %v1493, %v1541
      %1558 = vst.msk [vmem:[#allocation5] sm:$0xff] %vm1445, %v1542
      %1559 = vst.msk [vmem:[#allocation5 + $0x8] sm:$0xff] %vm1445, %v1543
      %1560 = vst.msk [vmem:[#allocation5 + $0x10] sm:$0xff] %vm1445, %v1544
      %1561 = vst.msk [vmem:[#allocation5 + $0x18] sm:$0xff] %vm1445, %v1545
      %1562 = vst.msk [vmem:[#allocation5 + $0x20] sm:$0xff] %vm1445, %v1546
      %1563 = vst.msk [vmem:[#allocation5 + $0x28] sm:$0xff] %vm1445, %v1547
      %1564 = vst.msk [vmem:[#allocation5 + $0x30] sm:$0xff] %vm1445, %v1548
      %1565 = vst.msk [vmem:[#allocation5 + $0x38] sm:$0xff] %vm1445, %v1549
      %1566 = vst.msk [vmem:[#allocation5 + $0x40] sm:$0xff] %vm1445, %v1550
      %1567 = vst.msk [vmem:[#allocation5 + $0x48] sm:$0xff] %vm1445, %v1551
      %1568 = vst.msk [vmem:[#allocation5 + $0x50] sm:$0xff] %vm1445, %v1552
      %1569 = vst.msk [vmem:[#allocation5 + $0x58] sm:$0xff] %vm1445, %v1553
      %1570 = vst.msk [vmem:[#allocation5 + $0x60] sm:$0xff] %vm1445, %v1554
      %1571 = vst.msk [vmem:[#allocation5 + $0x68] sm:$0xff] %vm1445, %v1555
      %1572 = vst.msk [vmem:[#allocation5 + $0x70] sm:$0xff] %vm1445, %v1556
      %1573 = vst.msk [vmem:[#allocation5 + $0x78] sm:$0xff] %vm1445, %v1557
      %v1574 = vld [vmem:[#allocation6] sm:$0xff]
      %v1575 = vld [vmem:[#allocation6 + $0x8] sm:$0xff]
      %v1576 = vld [vmem:[#allocation6 + $0x10] sm:$0xff]
      %v1577 = vld [vmem:[#allocation6 + $0x18] sm:$0xff]
      %v1578 = vld [vmem:[#allocation6 + $0x20] sm:$0xff]
      %v1579 = vld [vmem:[#allocation6 + $0x28] sm:$0xff]
      %v1580 = vld [vmem:[#allocation6 + $0x30] sm:$0xff]
      %v1581 = vld [vmem:[#allocation6 + $0x38] sm:$0xff]
      %v1582 = vld [vmem:[#allocation6 + $0x40] sm:$0xff]
      %v1583 = vld [vmem:[#allocation6 + $0x48] sm:$0xff]
      %v1584 = vld [vmem:[#allocation6 + $0x50] sm:$0xff]
      %v1585 = vld [vmem:[#allocation6 + $0x58] sm:$0xff]
      %v1586 = vld [vmem:[#allocation6 + $0x60] sm:$0xff]
      %v1587 = vld [vmem:[#allocation6 + $0x68] sm:$0xff]
      %v1588 = vld [vmem:[#allocation6 + $0x70] sm:$0xff]
      %v1589 = vld [vmem:[#allocation6 + $0x78] sm:$0xff]
      %1590 = vadd.xlane.f32.xlu0 %v1109
      %v1591 = vpop.xlane.xlu0 %1590
      %1592 = vadd.xlane.f32.xlu0 %v1110
      %v1593 = vpop.xlane.xlu0 %1592
      %1594 = vadd.xlane.f32.xlu0 %v1111
      %v1595 = vpop.xlane.xlu0 %1594
      %1596 = vadd.xlane.f32.xlu0 %v1112
      %v1597 = vpop.xlane.xlu0 %1596
      %1598 = vadd.xlane.f32.xlu0 %v1113
      %v1599 = vpop.xlane.xlu0 %1598
      %1600 = vadd.xlane.f32.xlu0 %v1114
      %v1601 = vpop.xlane.xlu0 %1600
      %1602 = vadd.xlane.f32.xlu0 %v1115
      %v1603 = vpop.xlane.xlu0 %1602
      %1604 = vadd.xlane.f32.xlu0 %v1116
      %v1605 = vpop.xlane.xlu0 %1604
      %1606 = vadd.xlane.f32.xlu0 %v1117
      %v1607 = vpop.xlane.xlu0 %1606
      %1608 = vadd.xlane.f32.xlu0 %v1118
      %v1609 = vpop.xlane.xlu0 %1608
      %1610 = vadd.xlane.f32.xlu0 %v1119
      %v1611 = vpop.xlane.xlu0 %1610
      %1612 = vadd.xlane.f32.xlu0 %v1120
      %v1613 = vpop.xlane.xlu0 %1612
      %1614 = vadd.xlane.f32.xlu0 %v1121
      %v1615 = vpop.xlane.xlu0 %1614
      %1616 = vadd.xlane.f32.xlu0 %v1122
      %v1617 = vpop.xlane.xlu0 %1616
      %1618 = vadd.xlane.f32.xlu0 %v1123
      %v1619 = vpop.xlane.xlu0 %1618
      %1620 = vadd.xlane.f32.xlu0 %v1124
      %v1621 = vpop.xlane.xlu0 %1620
      %v1622 = vadd.f32 %v1574, %v1591
      %v1623 = vadd.f32 %v1575, %v1593
      %v1624 = vadd.f32 %v1576, %v1595
      %v1625 = vadd.f32 %v1577, %v1597
      %v1626 = vadd.f32 %v1578, %v1599
      %v1627 = vadd.f32 %v1579, %v1601
      %v1628 = vadd.f32 %v1580, %v1603
      %v1629 = vadd.f32 %v1581, %v1605
      %v1630 = vadd.f32 %v1582, %v1607
      %v1631 = vadd.f32 %v1583, %v1609
      %v1632 = vadd.f32 %v1584, %v1611
      %v1633 = vadd.f32 %v1585, %v1613
      %v1634 = vadd.f32 %v1586, %v1615
      %v1635 = vadd.f32 %v1587, %v1617
      %v1636 = vadd.f32 %v1588, %v1619
      %v1637 = vadd.f32 %v1589, %v1621
      %1638 = vst.msk [vmem:[#allocation6] sm:$0xff] %vm1445, %v1622
      %1639 = vst.msk [vmem:[#allocation6 + $0x8] sm:$0xff] %vm1445, %v1623
      %1640 = vst.msk [vmem:[#allocation6 + $0x10] sm:$0xff] %vm1445, %v1624
      %1641 = vst.msk [vmem:[#allocation6 + $0x18] sm:$0xff] %vm1445, %v1625
      %1642 = vst.msk [vmem:[#allocation6 + $0x20] sm:$0xff] %vm1445, %v1626
      %1643 = vst.msk [vmem:[#allocation6 + $0x28] sm:$0xff] %vm1445, %v1627
      %1644 = vst.msk [vmem:[#allocation6 + $0x30] sm:$0xff] %vm1445, %v1628
      %1645 = vst.msk [vmem:[#allocation6 + $0x38] sm:$0xff] %vm1445, %v1629
      %1646 = vst.msk [vmem:[#allocation6 + $0x40] sm:$0xff] %vm1445, %v1630
      %1647 = vst.msk [vmem:[#allocation6 + $0x48] sm:$0xff] %vm1445, %v1631
      %1648 = vst.msk [vmem:[#allocation6 + $0x50] sm:$0xff] %vm1445, %v1632
      %1649 = vst.msk [vmem:[#allocation6 + $0x58] sm:$0xff] %vm1445, %v1633
      %1650 = vst.msk [vmem:[#allocation6 + $0x60] sm:$0xff] %vm1445, %v1634
      %1651 = vst.msk [vmem:[#allocation6 + $0x68] sm:$0xff] %vm1445, %v1635
      %1652 = vst.msk [vmem:[#allocation6 + $0x70] sm:$0xff] %vm1445, %v1636
      %1653 = vst.msk [vmem:[#allocation6 + $0x78] sm:$0xff] %vm1445, %v1637
    $region33: #{tpu_custom_call.1} parent=1 // pred_fallthru
      _
    // Predicated region
    $region34: #{tpu_custom_call.1} parent=1 // pred_check
      %p1654 = pneg %p31
    $region35: #{tpu_custom_call.1} parent=1 // pred_check_branch
      %1656 = sbr.rel (%p1654) target = $region37
    $region36: #{tpu_custom_call.1} parent=1 // pred_region
      %v1657 = vld [vmem:[#allocation3] sm:$0xff]
      %v1658 = vld [vmem:[#allocation3 + $0x8] sm:$0xff]
      %v1659 = vld [vmem:[#allocation3 + $0x10] sm:$0xff]
      %v1660 = vld [vmem:[#allocation3 + $0x18] sm:$0xff]
      %v1661 = vld [vmem:[#allocation3 + $0x20] sm:$0xff]
      %v1662 = vld [vmem:[#allocation3 + $0x28] sm:$0xff]
      %v1663 = vld [vmem:[#allocation3 + $0x30] sm:$0xff]
      %v1664 = vld [vmem:[#allocation3 + $0x38] sm:$0xff]
      %v1665 = vld [vmem:[#allocation3 + $0x40] sm:$0xff]
      %v1666 = vld [vmem:[#allocation3 + $0x48] sm:$0xff]
      %v1667 = vld [vmem:[#allocation3 + $0x50] sm:$0xff]
      %v1668 = vld [vmem:[#allocation3 + $0x58] sm:$0xff]
      %v1669 = vld [vmem:[#allocation3 + $0x60] sm:$0xff]
      %v1670 = vld [vmem:[#allocation3 + $0x68] sm:$0xff]
      %v1671 = vld [vmem:[#allocation3 + $0x70] sm:$0xff]
      %v1672 = vld [vmem:[#allocation3 + $0x78] sm:$0xff]
      %v1673 = vld [vmem:[#allocation4] sm:$0xff]
      %v1674 = vld [vmem:[#allocation4 + $0x8] sm:$0xff]
      %v1675 = vld [vmem:[#allocation4 + $0x10] sm:$0xff]
      %v1676 = vld [vmem:[#allocation4 + $0x18] sm:$0xff]
      %v1677 = vld [vmem:[#allocation4 + $0x20] sm:$0xff]
      %v1678 = vld [vmem:[#allocation4 + $0x28] sm:$0xff]
      %v1679 = vld [vmem:[#allocation4 + $0x30] sm:$0xff]
      %v1680 = vld [vmem:[#allocation4 + $0x38] sm:$0xff]
      %v1681 = vld [vmem:[#allocation4 + $0x40] sm:$0xff]
      %v1682 = vld [vmem:[#allocation4 + $0x48] sm:$0xff]
      %v1683 = vld [vmem:[#allocation4 + $0x50] sm:$0xff]
      %v1684 = vld [vmem:[#allocation4 + $0x58] sm:$0xff]
      %v1685 = vld [vmem:[#allocation4 + $0x60] sm:$0xff]
      %v1686 = vld [vmem:[#allocation4 + $0x68] sm:$0xff]
      %v1687 = vld [vmem:[#allocation4 + $0x70] sm:$0xff]
      %v1688 = vld [vmem:[#allocation4 + $0x78] sm:$0xff]
      %v1689 = vlog2.pop %v1673
      %v1690 = vmul.f32 %v1689, 0.6931472
      %v1691 = vlog2.pop %v1674
      %v1692 = vmul.f32 %v1691, 0.6931472
      %v1693 = vlog2.pop %v1675
      %v1694 = vmul.f32 %v1693, 0.6931472
      %v1695 = vlog2.pop %v1676
      %v1696 = vmul.f32 %v1695, 0.6931472
      %v1697 = vlog2.pop %v1677
      %v1698 = vmul.f32 %v1697, 0.6931472
      %v1699 = vlog2.pop %v1678
      %v1700 = vmul.f32 %v1699, 0.6931472
      %v1701 = vlog2.pop %v1679
      %v1702 = vmul.f32 %v1701, 0.6931472
      %v1703 = vlog2.pop %v1680
      %v1704 = vmul.f32 %v1703, 0.6931472
      %v1705 = vlog2.pop %v1681
      %v1706 = vmul.f32 %v1705, 0.6931472
      %v1707 = vlog2.pop %v1682
      %v1708 = vmul.f32 %v1707, 0.6931472
      %v1709 = vlog2.pop %v1683
      %v1710 = vmul.f32 %v1709, 0.6931472
      %v1711 = vlog2.pop %v1684
      %v1712 = vmul.f32 %v1711, 0.6931472
      %v1713 = vlog2.pop %v1685
      %v1714 = vmul.f32 %v1713, 0.6931472
      %v1715 = vlog2.pop %v1686
      %v1716 = vmul.f32 %v1715, 0.6931472
      %v1717 = vlog2.pop %v1687
      %v1718 = vmul.f32 %v1717, 0.6931472
      %v1719 = vlog2.pop %v1688
      %v1720 = vmul.f32 %v1719, 0.6931472
      %v1721 = vadd.f32 %v1657, %v1690
      %v1722 = vadd.f32 %v1658, %v1692
      %v1723 = vadd.f32 %v1659, %v1694
      %v1724 = vadd.f32 %v1660, %v1696
      %v1725 = vadd.f32 %v1661, %v1698
      %v1726 = vadd.f32 %v1662, %v1700
      %v1727 = vadd.f32 %v1663, %v1702
      %v1728 = vadd.f32 %v1664, %v1704
      %v1729 = vadd.f32 %v1665, %v1706
      %v1730 = vadd.f32 %v1666, %v1708
      %v1731 = vadd.f32 %v1667, %v1710
      %v1732 = vadd.f32 %v1668, %v1712
      %v1733 = vadd.f32 %v1669, %v1714
      %v1734 = vadd.f32 %v1670, %v1716
      %v1735 = vadd.f32 %v1671, %v1718
      %v1736 = vadd.f32 %v1672, %v1720
      %v1737 = vld [vmem:[#allocation6] sm:$0xff]
      %v1738 = vld [vmem:[#allocation6 + $0x8] sm:$0xff]
      %v1739 = vld [vmem:[#allocation6 + $0x10] sm:$0xff]
      %v1740 = vld [vmem:[#allocation6 + $0x18] sm:$0xff]
      %v1741 = vld [vmem:[#allocation6 + $0x20] sm:$0xff]
      %v1742 = vld [vmem:[#allocation6 + $0x28] sm:$0xff]
      %v1743 = vld [vmem:[#allocation6 + $0x30] sm:$0xff]
      %v1744 = vld [vmem:[#allocation6 + $0x38] sm:$0xff]
      %v1745 = vld [vmem:[#allocation6 + $0x40] sm:$0xff]
      %v1746 = vld [vmem:[#allocation6 + $0x48] sm:$0xff]
      %v1747 = vld [vmem:[#allocation6 + $0x50] sm:$0xff]
      %v1748 = vld [vmem:[#allocation6 + $0x58] sm:$0xff]
      %v1749 = vld [vmem:[#allocation6 + $0x60] sm:$0xff]
      %v1750 = vld [vmem:[#allocation6 + $0x68] sm:$0xff]
      %v1751 = vld [vmem:[#allocation6 + $0x70] sm:$0xff]
      %v1752 = vld [vmem:[#allocation6 + $0x78] sm:$0xff]
      %vm1753 = vcmp.gt.f32.partialorder %v1737, 0.0
      %vm1754 = vcmp.gt.f32.partialorder %v1738, 0.0
      %vm1755 = vcmp.gt.f32.partialorder %v1739, 0.0
      %vm1756 = vcmp.gt.f32.partialorder %v1740, 0.0
      %vm1757 = vcmp.gt.f32.partialorder %v1741, 0.0
      %vm1758 = vcmp.gt.f32.partialorder %v1742, 0.0
      %vm1759 = vcmp.gt.f32.partialorder %v1743, 0.0
      %vm1760 = vcmp.gt.f32.partialorder %v1744, 0.0
      %vm1761 = vcmp.gt.f32.partialorder %v1745, 0.0
      %vm1762 = vcmp.gt.f32.partialorder %v1746, 0.0
      %vm1763 = vcmp.gt.f32.partialorder %v1747, 0.0
      %vm1764 = vcmp.gt.f32.partialorder %v1748, 0.0
      %vm1765 = vcmp.gt.f32.partialorder %v1749, 0.0
      %vm1766 = vcmp.gt.f32.partialorder %v1750, 0.0
      %vm1767 = vcmp.gt.f32.partialorder %v1751, 0.0
      %vm1768 = vcmp.gt.f32.partialorder %v1752, 0.0
      %v1769 = vsel %vm1753, %v1737, 1.0
      %v1770 = vsel %vm1754, %v1738, 1.0
      %v1771 = vsel %vm1755, %v1739, 1.0
      %v1772 = vsel %vm1756, %v1740, 1.0
      %v1773 = vsel %vm1757, %v1741, 1.0
      %v1774 = vsel %vm1758, %v1742, 1.0
      %v1775 = vsel %vm1759, %v1743, 1.0
      %v1776 = vsel %vm1760, %v1744, 1.0
      %v1777 = vsel %vm1761, %v1745, 1.0
      %v1778 = vsel %vm1762, %v1746, 1.0
      %v1779 = vsel %vm1763, %v1747, 1.0
      %v1780 = vsel %vm1764, %v1748, 1.0
      %v1781 = vsel %vm1765, %v1749, 1.0
      %v1782 = vsel %vm1766, %v1750, 1.0
      %v1783 = vsel %vm1767, %v1751, 1.0
      %v1784 = vsel %vm1768, %v1752, 1.0
      %v1785 = vld [vmem:[#allocation5] sm:$0xff]
      %v1786 = vld [vmem:[#allocation5 + $0x8] sm:$0xff]
      %v1787 = vld [vmem:[#allocation5 + $0x10] sm:$0xff]
      %v1788 = vld [vmem:[#allocation5 + $0x18] sm:$0xff]
      %v1789 = vld [vmem:[#allocation5 + $0x20] sm:$0xff]
      %v1790 = vld [vmem:[#allocation5 + $0x28] sm:$0xff]
      %v1791 = vld [vmem:[#allocation5 + $0x30] sm:$0xff]
      %v1792 = vld [vmem:[#allocation5 + $0x38] sm:$0xff]
      %v1793 = vld [vmem:[#allocation5 + $0x40] sm:$0xff]
      %v1794 = vld [vmem:[#allocation5 + $0x48] sm:$0xff]
      %v1795 = vld [vmem:[#allocation5 + $0x50] sm:$0xff]
      %v1796 = vld [vmem:[#allocation5 + $0x58] sm:$0xff]
      %v1797 = vld [vmem:[#allocation5 + $0x60] sm:$0xff]
      %v1798 = vld [vmem:[#allocation5 + $0x68] sm:$0xff]
      %v1799 = vld [vmem:[#allocation5 + $0x70] sm:$0xff]
      %v1800 = vld [vmem:[#allocation5 + $0x78] sm:$0xff]
      %v1801 = vmul.f32 %v1737, %v1721
      %v1802 = vmul.f32 %v1738, %v1722
      %v1803 = vmul.f32 %v1739, %v1723
      %v1804 = vmul.f32 %v1740, %v1724
      %v1805 = vmul.f32 %v1741, %v1725
      %v1806 = vmul.f32 %v1742, %v1726
      %v1807 = vmul.f32 %v1743, %v1727
      %v1808 = vmul.f32 %v1744, %v1728
      %v1809 = vmul.f32 %v1745, %v1729
      %v1810 = vmul.f32 %v1746, %v1730
      %v1811 = vmul.f32 %v1747, %v1731
      %v1812 = vmul.f32 %v1748, %v1732
      %v1813 = vmul.f32 %v1749, %v1733
      %v1814 = vmul.f32 %v1750, %v1734
      %v1815 = vmul.f32 %v1751, %v1735
      %v1816 = vmul.f32 %v1752, %v1736
      %v1817 = vsub.f32 %v1785, %v1801
      %v1818 = vsub.f32 %v1786, %v1802
      %v1819 = vsub.f32 %v1787, %v1803
      %v1820 = vsub.f32 %v1788, %v1804
      %v1821 = vsub.f32 %v1789, %v1805
      %v1822 = vsub.f32 %v1790, %v1806
      %v1823 = vsub.f32 %v1791, %v1807
      %v1824 = vsub.f32 %v1792, %v1808
      %v1825 = vsub.f32 %v1793, %v1809
      %v1826 = vsub.f32 %v1794, %v1810
      %v1827 = vsub.f32 %v1795, %v1811
      %v1828 = vsub.f32 %v1796, %v1812
      %v1829 = vsub.f32 %v1797, %v1813
      %v1830 = vsub.f32 %v1798, %v1814
      %v1831 = vsub.f32 %v1799, %v1815
      %v1832 = vsub.f32 %v1800, %v1816
      %v1833 = vrcp.pop %v1769
      %v1834 = vmul.f32 %v1817, %v1833
      %v1835 = vrcp.pop %v1770
      %v1836 = vmul.f32 %v1818, %v1835
      %v1837 = vrcp.pop %v1771
      %v1838 = vmul.f32 %v1819, %v1837
      %v1839 = vrcp.pop %v1772
      %v1840 = vmul.f32 %v1820, %v1839
      %v1841 = vrcp.pop %v1773
      %v1842 = vmul.f32 %v1821, %v1841
      %v1843 = vrcp.pop %v1774
      %v1844 = vmul.f32 %v1822, %v1843
      %v1845 = vrcp.pop %v1775
      %v1846 = vmul.f32 %v1823, %v1845
      %v1847 = vrcp.pop %v1776
      %v1848 = vmul.f32 %v1824, %v1847
      %v1849 = vrcp.pop %v1777
      %v1850 = vmul.f32 %v1825, %v1849
      %v1851 = vrcp.pop %v1778
      %v1852 = vmul.f32 %v1826, %v1851
      %v1853 = vrcp.pop %v1779
      %v1854 = vmul.f32 %v1827, %v1853
      %v1855 = vrcp.pop %v1780
      %v1856 = vmul.f32 %v1828, %v1855
      %v1857 = vrcp.pop %v1781
      %v1858 = vmul.f32 %v1829, %v1857
      %v1859 = vrcp.pop %v1782
      %v1860 = vmul.f32 %v1830, %v1859
      %v1861 = vrcp.pop %v1783
      %v1862 = vmul.f32 %v1831, %v1861
      %v1863 = vrcp.pop %v1784
      %v1864 = vmul.f32 %v1832, %v1863
      %v1865 = vsel %vm1753, %v1834, 0.0
      %v1866 = vsel %vm1754, %v1836, 0.0
      %v1867 = vsel %vm1755, %v1838, 0.0
      %v1868 = vsel %vm1756, %v1840, 0.0
      %v1869 = vsel %vm1757, %v1842, 0.0
      %v1870 = vsel %vm1758, %v1844, 0.0
      %v1871 = vsel %vm1759, %v1846, 0.0
      %v1872 = vsel %vm1760, %v1848, 0.0
      %v1873 = vsel %vm1761, %v1850, 0.0
      %v1874 = vsel %vm1762, %v1852, 0.0
      %v1875 = vsel %vm1763, %v1854, 0.0
      %v1876 = vsel %vm1764, %v1856, 0.0
      %v1877 = vsel %vm1765, %v1858, 0.0
      %v1878 = vsel %vm1766, %v1860, 0.0
      %v1879 = vsel %vm1767, %v1862, 0.0
      %v1880 = vsel %vm1768, %v1864, 0.0
      %v1881 = vmul.f32 %v1865, -1.0
      %v1882 = vmul.f32 %v1866, -1.0
      %v1883 = vmul.f32 %v1867, -1.0
      %v1884 = vmul.f32 %v1868, -1.0
      %v1885 = vmul.f32 %v1869, -1.0
      %v1886 = vmul.f32 %v1870, -1.0
      %v1887 = vmul.f32 %v1871, -1.0
      %v1888 = vmul.f32 %v1872, -1.0
      %v1889 = vmul.f32 %v1873, -1.0
      %v1890 = vmul.f32 %v1874, -1.0
      %v1891 = vmul.f32 %v1875, -1.0
      %v1892 = vmul.f32 %v1876, -1.0
      %v1893 = vmul.f32 %v1877, -1.0
      %v1894 = vmul.f32 %v1878, -1.0
      %v1895 = vmul.f32 %v1879, -1.0
      %v1896 = vmul.f32 %v1880, -1.0
      %vm1897 = vcmask 7168
      %1898 = vst.msk [vmem:[%s4] sm:$0xff] %vm1897, %v1881
      %1899 = vst.msk [vmem:[%s4 + $0x8] sm:$0xff] %vm1897, %v1882
      %1900 = vst.msk [vmem:[%s4 + $0x10] sm:$0xff] %vm1897, %v1883
      %1901 = vst.msk [vmem:[%s4 + $0x18] sm:$0xff] %vm1897, %v1884
      %1902 = vst.msk [vmem:[%s4 + $0x20] sm:$0xff] %vm1897, %v1885
      %1903 = vst.msk [vmem:[%s4 + $0x28] sm:$0xff] %vm1897, %v1886
      %1904 = vst.msk [vmem:[%s4 + $0x30] sm:$0xff] %vm1897, %v1887
      %1905 = vst.msk [vmem:[%s4 + $0x38] sm:$0xff] %vm1897, %v1888
      %1906 = vst.msk [vmem:[%s4 + $0x40] sm:$0xff] %vm1897, %v1889
      %1907 = vst.msk [vmem:[%s4 + $0x48] sm:$0xff] %vm1897, %v1890
      %1908 = vst.msk [vmem:[%s4 + $0x50] sm:$0xff] %vm1897, %v1891
      %1909 = vst.msk [vmem:[%s4 + $0x58] sm:$0xff] %vm1897, %v1892
      %1910 = vst.msk [vmem:[%s4 + $0x60] sm:$0xff] %vm1897, %v1893
      %1911 = vst.msk [vmem:[%s4 + $0x68] sm:$0xff] %vm1897, %v1894
      %1912 = vst.msk [vmem:[%s4 + $0x70] sm:$0xff] %vm1897, %v1895
      %1913 = vst.msk [vmem:[%s4 + $0x78] sm:$0xff] %vm1897, %v1896
    $region37: #{tpu_custom_call.1} parent=1 // pred_fallthru
      _
    // Predicated region
    $region38: #{tpu_custom_call.1} parent=1 // pred_check
      _
    $region39: #{tpu_custom_call.1} parent=1 // pred_check_branch
      %1915 = sbr.rel (0) target = $region41
    $region40: #{tpu_custom_call.1} parent=1 // pred_region
      _
    $region41: #{tpu_custom_call.1} parent=1 // pred_fallthru
      _
    // Predicated region
    $region42: #{tpu_custom_call.1} parent=1 // pred_check
      _
    $region43: #{tpu_custom_call.1} parent=1 // pred_check_branch
      %1917 = sbr.rel (0) target = $region45
    $region44: #{tpu_custom_call.1} parent=1 // pred_region
      _
    $region45: #{tpu_custom_call.1} parent=1 // pred_fallthru
      _
    %1918 = vsyncpa [#allocation8], 1

</llo_original>
